<compile_context>
chip_gen: v7x
topology: tpu7x:2x2x1
jax: 0.10.0
libtpu: 0.0.40
codegen_flags: <defaults>
</compile_context>

<pallas_src>
import functools

import jax
import jax.numpy as jnp
from jax.experimental import pallas as pl
from jax.experimental.pallas import tpu as pltpu


# ---------------------------------------------------------------------------
# Pallas kernel: per-RoI Kronecker-weight pooling
#   out[k, c, p*PWp + q] = sum_{hw} F[bidx, c, hw] * A[k, p, hw] * B[k, q, hw]
# A/B arrive lane-expanded over the flattened hw axis; PWp = PW rounded up to
# a multiple of 8 so every scratch slab / store is sublane-aligned.
# ---------------------------------------------------------------------------
def _roi_pool_kernel(bidx_ref, a_ref, b_ref, f_ref, o_ref, m_ref,
                     *, compute_dtype):
    del bidx_ref  # only used by the index_maps
    tk, ph, _hw = a_ref.shape
    pw = b_ref.shape[1]
    pwp = o_ref.shape[2] // ph

    feat = f_ref[0].astype(compute_dtype)                    # [C, HW]
    m_ref[...] = jnp.zeros_like(m_ref)                       # zero the pad rows

    for k in range(tk):                                      # static RoI tile loop
        a_k = a_ref[k]                                       # [PH, HW]
        b_k = b_ref[k]                                       # [PW, HW]
        # Build Kronecker weight: M[p*PWp + q, :] = A[p, :] * B[q, :]
        for p in range(ph):
            m_ref[p * pwp:p * pwp + pw, :] = (
                a_k[p:p + 1, :] * b_k).astype(compute_dtype)
        # One MXU matmul:  [C, HW] x [PH*PWp, HW]^T -> [C, PH*PWp]
        out = jnp.einsum('ch,ph->cp', feat, m_ref[...],
                         preferred_element_type=jnp.float32)
        o_ref[k] = out.astype(o_ref.dtype)


def _roi_pool_level(feats_flat, a_exp, b_exp, tile_bidx, roi_tile,
                    compute_dtype):
    """Pool all (padded) RoIs against one pyramid level's flattened features."""
    bn, c, hw = (int(s) for s in feats_flat.shape)
    kp, ph, _ = (int(s) for s in a_exp.shape)
    pw = int(b_exp.shape[1])
    pwp = ((pw + 7) // 8) * 8
    num_tiles = kp // roi_tile

    kernel = functools.partial(_roi_pool_kernel, compute_dtype=compute_dtype)
    return pl.pallas_call(
        kernel,
        out_shape=jax.ShapeDtypeStruct((kp, c, ph * pwp), feats_flat.dtype),
        grid_spec=pltpu.PrefetchScalarGridSpec(
            num_scalar_prefetch=1,
            grid=(num_tiles,),
            in_specs=[
                pl.BlockSpec((roi_tile, ph, hw), lambda t, bidx: (t, 0, 0)),
                pl.BlockSpec((roi_tile, pw, hw), lambda t, bidx: (t, 0, 0)),
                # One image's features per tile; consecutive tiles of the same
                # image keep the same block index, so Pallas skips the re-DMA.
                pl.BlockSpec((1, c, hw), lambda t, bidx: (bidx[t], 0, 0)),
            ],
            out_specs=pl.BlockSpec((roi_tile, c, ph * pwp),
                                   lambda t, bidx: (t, 0, 0)),
            scratch_shapes=[pltpu.VMEM((ph * pwp, hw), compute_dtype)],
        ),
        compiler_params=pltpu.CompilerParams(
            dimension_semantics=("parallel",)),
    )(tile_bidx, a_exp, b_exp, feats_flat)


# ---------------------------------------------------------------------------
# Weight builders (cheap JAX glue on tiny arrays)
# ---------------------------------------------------------------------------
def _upsample_weight(in_size, out_size):
    """F.interpolate(mode='bilinear', align_corners=False) weights [out, in]."""
    o = jnp.arange(out_size, dtype=jnp.float32)
    src = (o + 0.5) * (float(in_size) / float(out_size)) - 0.5
    src = jnp.maximum(src, 0.0)
    i0 = jnp.minimum(jnp.floor(src), in_size - 1)
    i1 = jnp.minimum(i0 + 1, in_size - 1)
    lam = src - i0
    idx = jnp.arange(in_size, dtype=jnp.float32)
    w = (idx[None, :] == i0[:, None]) * (1.0 - lam)[:, None] \
        + (idx[None, :] == i1[:, None]) * lam[:, None]
    return w.astype(jnp.float32)


def _roi_axis_weights(start, bin_size, grid, pooled, feat_size):
    """torchvision roi_align (aligned=False) per-axis weights [K, pooled, feat]
    with the sample-grid averaging folded in."""
    p = jnp.arange(pooled, dtype=jnp.float32)
    g = jnp.arange(grid, dtype=jnp.float32)
    y = start[:, None, None] + bin_size[:, None, None] * (
        p[None, :, None] + (g[None, None, :] + 0.5) / float(grid))
    valid = (y >= -1.0) & (y <= float(feat_size))
    yc = jnp.maximum(y, 0.0)
    lo = jnp.minimum(jnp.floor(yc), feat_size - 1)
    hi = jnp.minimum(lo + 1, feat_size - 1)
    lam = yc - lo
    idx = jnp.arange(feat_size, dtype=jnp.float32)
    w = (idx == lo[..., None]) * (1.0 - lam)[..., None] \
        + (idx == hi[..., None]) * lam[..., None]
    w = jnp.where(valid[..., None], w, 0.0)
    return w.mean(axis=2).astype(jnp.float32)


def _level_weights(a_roi, b_roi, h_lvl, w_lvl, h0, w0):
    """Compose the RoI weights (defined on the fused H0xW0 grid) with the
    level's bilinear-upsample weights and lane-expand over flattened h*W+w."""
    if h_lvl != h0:
        a_roi = jnp.einsum('kpy,yh->kph', a_roi, _upsample_weight(h_lvl, h0))
    if w_lvl != w0:
        b_roi = jnp.einsum('kqx,xw->kqw', b_roi, _upsample_weight(w_lvl, w0))
    a_exp = jnp.repeat(a_roi, w_lvl, axis=2)   # A[k,p,h*W+w] = A[k,p,h]
    b_exp = jnp.tile(b_roi, (1, 1, h_lvl))     # B[k,q,h*W+w] = B[k,q,w]
    return a_exp, b_exp


# ---------------------------------------------------------------------------
# Module
# ---------------------------------------------------------------------------
class MultiScaleFusionRoIAlign:
    def __init__(self, output_size, spatial_scale=1.0, sampling_ratio=-1,
                 roi_tile=8, compute_dtype=jnp.float32):
        if isinstance(output_size, int):
            output_size = (output_size, output_size)
        self.output_size = tuple(output_size)
        self.spatial_scale = spatial_scale
        self.sampling_ratio = sampling_ratio
        self.roi_tile = int(roi_tile)
        # bf16 halves weight/feature DMA on v6e/v7x; f32 keeps exact reference
        # numerics (accumulation is always f32 on the MXU).
        self.compute_dtype = compute_dtype

    def __call__(self, x, boxes, metas):
        """
        x:      list of [B, C_i, H_i, W_i] feature maps (finest first).
        boxes:  list of [N_b, >=4] per-image boxes (x1, y1, x2, y2).
        metas:  list of dicts with 'ratio' (rH, rW), 'offset' (top, left),
                'shape' (H, W).
        Returns: list of [N_b, C_total, OH, OW] pooled RoI features.
        """
        h0, w0 = (int(s) for s in x[0].shape[2:])
        out_dtype = x[0].dtype

        if not isinstance(boxes, (list, tuple)):
            # TODO(synk): Tensor[K, 5] rois path (rois2boxes) not implemented.
            raise NotImplementedError("pass boxes as a per-image list")
        rois = [jnp.asarray(d)[:, :4].astype(jnp.float32) for d in boxes]

        # Box remap to the fused feature grid (matches the reference exactly,
        # including the single `scale` taken from the first meta).
        rois_rp, scale = [], None
        for dets, meta in zip(rois, metas):
            rH, rW = meta['ratio']
            top, left = meta['offset']
            x1 = dets[:, 0] * rW + left
            y1 = dets[:, 1] * rH + top
            x2 = dets[:, 2] * rW + left
            y2 = dets[:, 3] * rH + top
            rois_rp.append(jnp.stack([x1, y1, x2, y2], axis=1))
            if scale is None:
                shape = list(meta['shape'])
                shape_h = int(shape[0] * rH + 2 * top)
                shape_w = int(shape[1] * rW + 2 * left)
                scale = (w0 / shape_w, h0 / shape_h)       # (scale_x, scale_y)

        counts = [int(r.shape[0]) for r in rois_rp]
        tk = self.roi_tile

        # Pad each image's RoI set to a multiple of the tile size so a tile
        # never straddles images (one feature block per tile).
        padded, pad_counts, tile_bidx = [], [], []
        for i, r in enumerate(rois_rp):
            n = int(r.shape[0])
            npad = ((n + tk - 1) // tk) * tk
            if npad > n:
                r = jnp.concatenate(
                    [r, jnp.zeros((npad - n, 4), jnp.float32)], axis=0)
            padded.append(r)
            pad_counts.append(npad)
            tile_bidx.append(jnp.full((npad // tk,), i, dtype=jnp.int32))

        c_total = sum(int(f.shape[1]) for f in x)
        oh, ow = self.output_size
        kp = sum(pad_counts)
        if kp == 0:
            return [jnp.zeros((0, c_total, oh, ow), out_dtype) for _ in rois]

        all_rois = jnp.concatenate(padded, axis=0)          # [Kp, 4]
        tile_bidx = jnp.concatenate(tile_bidx, axis=0)      # [T] int32

        if self.output_size[0] == 1:
            pooled, reduce_max = (7, 7), True
        else:
            pooled, reduce_max = self.output_size, False
        ph, pw = pooled
        pwp = ((pw + 7) // 8) * 8

        scale_x, scale_y = scale
        x1, y1, x2, y2 = (all_rois[:, 0], all_rois[:, 1],
                          all_rois[:, 2], all_rois[:, 3])
        roi_start_w = x1 * scale_x
        roi_start_h = y1 * scale_y
        roi_w = jnp.maximum(x2 * scale_x - roi_start_w, 1.0)
        roi_h = jnp.maximum(y2 * scale_y - roi_start_h, 1.0)
        bin_h = roi_h / ph
        bin_w = roi_w / pw

        if self.sampling_ratio > 0:
            grid_h = grid_w = int(self.sampling_ratio)
        else:
            # TODO(synk): adaptive per-RoI sampling grid (sampling_ratio <= 0)
            # is data-dependent; falling back to a fixed 2x2 grid.
            grid_h = grid_w = 2

        a_roi = _roi_axis_weights(roi_start_h, bin_h, grid_h, ph, h0)  # [Kp,PH,H0]
        b_roi = _roi_axis_weights(roi_start_w, bin_w, grid_w, pw, w0)  # [Kp,PW,W0]

        # Pool each pyramid level directly on its original map (the bilinear
        # upsample is folded into the weights); fuse along channels afterwards.
        pooled_levels = []
        for feats in x:
            bn, c, hs, ws = (int(s) for s in feats.shape)
            a_exp, b_exp = _level_weights(a_roi, b_roi, hs, ws, h0, w0)
            f_flat = feats.reshape(bn, c, hs * ws)
            pooled_levels.append(
                _roi_pool_level(f_flat, a_exp, b_exp, tile_bidx, tk,
                                self.compute_dtype))
        aligned = jnp.concatenate(pooled_levels, axis=1)     # [Kp, Ctot, PH*PWp]
        aligned = aligned.reshape(kp, c_total, ph, pwp)[..., :pw]

        if reduce_max:                                       # output_size == 1
            aligned = aligned.max(axis=(-2, -1), keepdims=True)

        out, off = [], 0
        for n, npad in zip(counts, pad_counts):
            out.append(aligned[off:off + n])
            off += npad
        return out


# ---------------------------------------------------------------------------
# Demo
# ---------------------------------------------------------------------------
if __name__ == "__main__":
    key = jax.random.PRNGKey(0)
    k0, k1, k2, kb0, kb1 = jax.random.split(key, 5)

    B = 2
    # Multi-scale feature maps (finest first), NCHW.
    x = [
        jax.random.normal(k0, (B, 4, 16, 16), dtype=jnp.float32),
        jax.random.normal(k1, (B, 8, 8, 8), dtype=jnp.float32),
        jax.random.normal(k2, (B, 16, 4, 4), dtype=jnp.float32),
    ]

    def make_boxes(k, n):
        xy = jax.random.uniform(k, (n, 2), minval=0.0, maxval=40.0)
        wh = jax.random.uniform(jax.random.fold_in(k, 1), (n, 2),
                                minval=4.0, maxval=20.0)
        return jnp.concatenate([xy, xy + wh], axis=1)        # [n, 4] x1 y1 x2 y2

    boxes = [make_boxes(kb0, 3), make_boxes(kb1, 2)]
    metas = [
        {'ratio': (1.0, 1.0), 'offset': (0.0, 0.0), 'shape': (64, 64)},
        {'ratio': (1.0, 1.0), 'offset': (0.0, 0.0), 'shape': (64, 64)},
    ]

    # Regular RoIAlign branch (output_size = 7)
    pooler = MultiScaleFusionRoIAlign(output_size=7, sampling_ratio=2)
    out = pooler(x, boxes, metas)
    out = [jax.block_until_ready(o) for o in out]
    assert out[0].shape == (3, 28, 7, 7) and out[1].shape == (2, 28, 7, 7)
    assert bool(jnp.isfinite(out[0]).all()) and bool(jnp.isfinite(out[1]).all())

    # output_size == 1 branch (7x7 RoIAlign then 7x7 max)
    pooler1 = MultiScaleFusionRoIAlign(output_size=1, sampling_ratio=2)
    out1 = pooler1(x, boxes, metas)
    out1 = [jax.block_until_ready(o) for o in out1]
    assert out1[0].shape == (3, 28, 1, 1) and out1[1].shape == (2, 28, 1, 1)

    print("KERNEL_OK")
</pallas_src>

<mosaic_0001>
module attributes {stable_mosaic.version = 11 : i64} {
  func.func @_roi_pool_kernel(%arg0: i32, %arg1: memref<2xi32, #tpu.memory_space<smem>>, %arg2: memref<8x7x256xf32, #tpu.memory_space<vmem>>, %arg3: memref<8x7x256xf32, #tpu.memory_space<vmem>>, %arg4: memref<1x4x256xf32, #tpu.memory_space<vmem>>, %arg5: memref<8x4x56xf32, #tpu.memory_space<vmem>>, %arg6: memref<56x256xf32, #tpu.memory_space<vmem>>) attributes {dimension_semantics = [#tpu.dimension_semantics<parallel>], iteration_bounds = array<i64: 2>, scalar_prefetch = 1 : i64, scratch_operands = 1 : i64, tpu.core_type = #tpu.core_type<tc>, window_params = [{transform_indices = @transform_0, window_bounds = array<i64: 8, 7, 256>}, {transform_indices = @transform_1, window_bounds = array<i64: 8, 7, 256>}, {transform_indices = @transform_2, window_bounds = array<i64: 1, 4, 256>}, {transform_indices = @transform_3, window_bounds = array<i64: 8, 4, 56>}]} {
    %c0 = arith.constant 0 : index
    %c0_0 = arith.constant 0 : index
    %c0_1 = arith.constant 0 : index
    %0 = vector.load %arg4[%c0, %c0_0, %c0_1] : memref<1x4x256xf32, #tpu.memory_space<vmem>>, vector<1x4x256xf32>
    %1 = vector.shape_cast %0 : vector<1x4x256xf32> to vector<4x256xf32>
    %cst = arith.constant 0.000000e+00 : f32
    %2 = vector.broadcast %cst : f32 to vector<56x256xf32>
    %c0_2 = arith.constant 0 : index
    %c0_3 = arith.constant 0 : index
    %3 = vector.load %arg6[%c0_2, %c0_3] : memref<56x256xf32, #tpu.memory_space<vmem>>, vector<56x256xf32>
    tpu.vector_store %arg6[%c0_2, %c0_3], %2 {strides = array<i32>} : memref<56x256xf32, #tpu.memory_space<vmem>>, vector<56x256xf32>,
    %c0_4 = arith.constant 0 : index
    %c0_5 = arith.constant 0 : index
    %c0_6 = arith.constant 0 : index
    %4 = vector.load %arg2[%c0_4, %c0_5, %c0_6] : memref<8x7x256xf32, #tpu.memory_space<vmem>>, vector<1x7x256xf32>
    %5 = vector.shape_cast %4 : vector<1x7x256xf32> to vector<7x256xf32>
    %c0_7 = arith.constant 0 : index
    %c0_8 = arith.constant 0 : index
    %c0_9 = arith.constant 0 : index
    %6 = vector.load %arg3[%c0_7, %c0_8, %c0_9] : memref<8x7x256xf32, #tpu.memory_space<vmem>>, vector<1x7x256xf32>
    %7 = vector.shape_cast %6 : vector<1x7x256xf32> to vector<7x256xf32>
    %8 = vector.extract_strided_slice %5 {offsets = [0, 0], sizes = [1, 256], strides = [1, 1]} : vector<7x256xf32> to vector<1x256xf32>
    %9 = vector.broadcast %8 : vector<1x256xf32> to vector<7x256xf32>
    %10 = arith.mulf %9, %7 : vector<7x256xf32>
    %c0_10 = arith.constant 0 : index
    %c0_11 = arith.constant 0 : index
    %11 = vector.load %arg6[%c0_10, %c0_11] : memref<56x256xf32, #tpu.memory_space<vmem>>, vector<7x256xf32>
    tpu.vector_store %arg6[%c0_10, %c0_11], %10 {strides = array<i32>} : memref<56x256xf32, #tpu.memory_space<vmem>>, vector<7x256xf32>,
    %12 = vector.extract_strided_slice %5 {offsets = [1, 0], sizes = [1, 256], strides = [1, 1]} : vector<7x256xf32> to vector<1x256xf32>
    %13 = vector.broadcast %12 : vector<1x256xf32> to vector<7x256xf32>
    %14 = arith.mulf %13, %7 : vector<7x256xf32>
    %c8 = arith.constant 8 : index
    %c0_12 = arith.constant 0 : index
    %15 = vector.load %arg6[%c8, %c0_12] : memref<56x256xf32, #tpu.memory_space<vmem>>, vector<7x256xf32>
    tpu.vector_store %arg6[%c8, %c0_12], %14 {strides = array<i32>} : memref<56x256xf32, #tpu.memory_space<vmem>>, vector<7x256xf32>,
    %16 = vector.extract_strided_slice %5 {offsets = [2, 0], sizes = [1, 256], strides = [1, 1]} : vector<7x256xf32> to vector<1x256xf32>
    %17 = vector.broadcast %16 : vector<1x256xf32> to vector<7x256xf32>
    %18 = arith.mulf %17, %7 : vector<7x256xf32>
    %c16 = arith.constant 16 : index
    %c0_13 = arith.constant 0 : index
    %19 = vector.load %arg6[%c16, %c0_13] : memref<56x256xf32, #tpu.memory_space<vmem>>, vector<7x256xf32>
    tpu.vector_store %arg6[%c16, %c0_13], %18 {strides = array<i32>} : memref<56x256xf32, #tpu.memory_space<vmem>>, vector<7x256xf32>,
    %20 = vector.extract_strided_slice %5 {offsets = [3, 0], sizes = [1, 256], strides = [1, 1]} : vector<7x256xf32> to vector<1x256xf32>
    %21 = vector.broadcast %20 : vector<1x256xf32> to vector<7x256xf32>
    %22 = arith.mulf %21, %7 : vector<7x256xf32>
    %c24 = arith.constant 24 : index
    %c0_14 = arith.constant 0 : index
    %23 = vector.load %arg6[%c24, %c0_14] : memref<56x256xf32, #tpu.memory_space<vmem>>, vector<7x256xf32>
    tpu.vector_store %arg6[%c24, %c0_14], %22 {strides = array<i32>} : memref<56x256xf32, #tpu.memory_space<vmem>>, vector<7x256xf32>,
    %24 = vector.extract_strided_slice %5 {offsets = [4, 0], sizes = [1, 256], strides = [1, 1]} : vector<7x256xf32> to vector<1x256xf32>
    %25 = vector.broadcast %24 : vector<1x256xf32> to vector<7x256xf32>
    %26 = arith.mulf %25, %7 : vector<7x256xf32>
    %c32 = arith.constant 32 : index
    %c0_15 = arith.constant 0 : index
    %27 = vector.load %arg6[%c32, %c0_15] : memref<56x256xf32, #tpu.memory_space<vmem>>, vector<7x256xf32>
    tpu.vector_store %arg6[%c32, %c0_15], %26 {strides = array<i32>} : memref<56x256xf32, #tpu.memory_space<vmem>>, vector<7x256xf32>,
    %28 = vector.extract_strided_slice %5 {offsets = [5, 0], sizes = [1, 256], strides = [1, 1]} : vector<7x256xf32> to vector<1x256xf32>
    %29 = vector.broadcast %28 : vector<1x256xf32> to vector<7x256xf32>
    %30 = arith.mulf %29, %7 : vector<7x256xf32>
    %c40 = arith.constant 40 : index
    %c0_16 = arith.constant 0 : index
    %31 = vector.load %arg6[%c40, %c0_16] : memref<56x256xf32, #tpu.memory_space<vmem>>, vector<7x256xf32>
    tpu.vector_store %arg6[%c40, %c0_16], %30 {strides = array<i32>} : memref<56x256xf32, #tpu.memory_space<vmem>>, vector<7x256xf32>,
    %32 = vector.extract_strided_slice %5 {offsets = [6, 0], sizes = [1, 256], strides = [1, 1]} : vector<7x256xf32> to vector<1x256xf32>
    %33 = vector.broadcast %32 : vector<1x256xf32> to vector<7x256xf32>
    %34 = arith.mulf %33, %7 : vector<7x256xf32>
    %c48 = arith.constant 48 : index
    %c0_17 = arith.constant 0 : index
    %35 = vector.load %arg6[%c48, %c0_17] : memref<56x256xf32, #tpu.memory_space<vmem>>, vector<7x256xf32>
    tpu.vector_store %arg6[%c48, %c0_17], %34 {strides = array<i32>} : memref<56x256xf32, #tpu.memory_space<vmem>>, vector<7x256xf32>,
    %c0_18 = arith.constant 0 : index
    %c0_19 = arith.constant 0 : index
    %36 = vector.load %arg6[%c0_18, %c0_19] : memref<56x256xf32, #tpu.memory_space<vmem>>, vector<56x256xf32>
    "tpu.trace_start"() <{level = 10 : i32, message = "ch,ph->cp"}> : () -> ()
    %cst_20 = arith.constant dense<0.000000e+00> : vector<4x56xf32>
    %37 = tpu.matmul %1, %36, %cst_20 {dimension_numbers = #tpu.dot_dimension_numbers<[1], [1], [0], [0], [0, 0, 1, 0], [], []>} : vector<4x256xf32>, vector<56x256xf32>, vector<4x56xf32> -> vector<4x56xf32>
    "tpu.trace_stop"() : () -> ()
    %c0_21 = arith.constant 0 : index
    %c0_22 = arith.constant 0 : index
    %c0_23 = arith.constant 0 : index
    %38 = vector.load %arg5[%c0_21, %c0_22, %c0_23] : memref<8x4x56xf32, #tpu.memory_space<vmem>>, vector<1x4x56xf32>
    %39 = vector.shape_cast %38 : vector<1x4x56xf32> to vector<4x56xf32>
    %40 = vector.shape_cast %37 : vector<4x56xf32> to vector<1x4x56xf32>
    tpu.vector_store %arg5[%c0_21, %c0_22, %c0_23], %40 {strides = array<i32>} : memref<8x4x56xf32, #tpu.memory_space<vmem>>, vector<1x4x56xf32>,
    %c1 = arith.constant 1 : index
    %c0_24 = arith.constant 0 : index
    %c0_25 = arith.constant 0 : index
    %41 = vector.load %arg2[%c1, %c0_24, %c0_25] : memref<8x7x256xf32, #tpu.memory_space<vmem>>, vector<1x7x256xf32>
    %42 = vector.shape_cast %41 : vector<1x7x256xf32> to vector<7x256xf32>
    %c1_26 = arith.constant 1 : index
    %c0_27 = arith.constant 0 : index
    %c0_28 = arith.constant 0 : index
    %43 = vector.load %arg3[%c1_26, %c0_27, %c0_28] : memref<8x7x256xf32, #tpu.memory_space<vmem>>, vector<1x7x256xf32>
    %44 = vector.shape_cast %43 : vector<1x7x256xf32> to vector<7x256xf32>
    %45 = vector.extract_strided_slice %42 {offsets = [0, 0], sizes = [1, 256], strides = [1, 1]} : vector<7x256xf32> to vector<1x256xf32>
    %46 = vector.broadcast %45 : vector<1x256xf32> to vector<7x256xf32>
    %47 = arith.mulf %46, %44 : vector<7x256xf32>
    %c0_29 = arith.constant 0 : index
    %c0_30 = arith.constant 0 : index
    %48 = vector.load %arg6[%c0_29, %c0_30] : memref<56x256xf32, #tpu.memory_space<vmem>>, vector<7x256xf32>
    tpu.vector_store %arg6[%c0_29, %c0_30], %47 {strides = array<i32>} : memref<56x256xf32, #tpu.memory_space<vmem>>, vector<7x256xf32>,
    %49 = vector.extract_strided_slice %42 {offsets = [1, 0], sizes = [1, 256], strides = [1, 1]} : vector<7x256xf32> to vector<1x256xf32>
    %50 = vector.broadcast %49 : vector<1x256xf32> to vector<7x256xf32>
    %51 = arith.mulf %50, %44 : vector<7x256xf32>
    %c8_31 = arith.constant 8 : index
    %c0_32 = arith.constant 0 : index
    %52 = vector.load %arg6[%c8_31, %c0_32] : memref<56x256xf32, #tpu.memory_space<vmem>>, vector<7x256xf32>
    tpu.vector_store %arg6[%c8_31, %c0_32], %51 {strides = array<i32>} : memref<56x256xf32, #tpu.memory_space<vmem>>, vector<7x256xf32>,
    %53 = vector.extract_strided_slice %42 {offsets = [2, 0], sizes = [1, 256], strides = [1, 1]} : vector<7x256xf32> to vector<1x256xf32>
    %54 = vector.broadcast %53 : vector<1x256xf32> to vector<7x256xf32>
    %55 = arith.mulf %54, %44 : vector<7x256xf32>
    %c16_33 = arith.constant 16 : index
    %c0_34 = arith.constant 0 : index
    %56 = vector.load %arg6[%c16_33, %c0_34] : memref<56x256xf32, #tpu.memory_space<vmem>>, vector<7x256xf32>
    tpu.vector_store %arg6[%c16_33, %c0_34], %55 {strides = array<i32>} : memref<56x256xf32, #tpu.memory_space<vmem>>, vector<7x256xf32>,
    %57 = vector.extract_strided_slice %42 {offsets = [3, 0], sizes = [1, 256], strides = [1, 1]} : vector<7x256xf32> to vector<1x256xf32>
    %58 = vector.broadcast %57 : vector<1x256xf32> to vector<7x256xf32>
    %59 = arith.mulf %58, %44 : vector<7x256xf32>
    %c24_35 = arith.constant 24 : index
    %c0_36 = arith.constant 0 : index
    %60 = vector.load %arg6[%c24_35, %c0_36] : memref<56x256xf32, #tpu.memory_space<vmem>>, vector<7x256xf32>
    tpu.vector_store %arg6[%c24_35, %c0_36], %59 {strides = array<i32>} : memref<56x256xf32, #tpu.memory_space<vmem>>, vector<7x256xf32>,
    %61 = vector.extract_strided_slice %42 {offsets = [4, 0], sizes = [1, 256], strides = [1, 1]} : vector<7x256xf32> to vector<1x256xf32>
    %62 = vector.broadcast %61 : vector<1x256xf32> to vector<7x256xf32>
    %63 = arith.mulf %62, %44 : vector<7x256xf32>
    %c32_37 = arith.constant 32 : index
    %c0_38 = arith.constant 0 : index
    %64 = vector.load %arg6[%c32_37, %c0_38] : memref<56x256xf32, #tpu.memory_space<vmem>>, vector<7x256xf32>
    tpu.vector_store %arg6[%c32_37, %c0_38], %63 {strides = array<i32>} : memref<56x256xf32, #tpu.memory_space<vmem>>, vector<7x256xf32>,
    %65 = vector.extract_strided_slice %42 {offsets = [5, 0], sizes = [1, 256], strides = [1, 1]} : vector<7x256xf32> to vector<1x256xf32>
    %66 = vector.broadcast %65 : vector<1x256xf32> to vector<7x256xf32>
    %67 = arith.mulf %66, %44 : vector<7x256xf32>
    %c40_39 = arith.constant 40 : index
    %c0_40 = arith.constant 0 : index
    %68 = vector.load %arg6[%c40_39, %c0_40] : memref<56x256xf32, #tpu.memory_space<vmem>>, vector<7x256xf32>
    tpu.vector_store %arg6[%c40_39, %c0_40], %67 {strides = array<i32>} : memref<56x256xf32, #tpu.memory_space<vmem>>, vector<7x256xf32>,
    %69 = vector.extract_strided_slice %42 {offsets = [6, 0], sizes = [1, 256], strides = [1, 1]} : vector<7x256xf32> to vector<1x256xf32>
    %70 = vector.broadcast %69 : vector<1x256xf32> to vector<7x256xf32>
    %71 = arith.mulf %70, %44 : vector<7x256xf32>
    %c48_41 = arith.constant 48 : index
    %c0_42 = arith.constant 0 : index
    %72 = vector.load %arg6[%c48_41, %c0_42] : memref<56x256xf32, #tpu.memory_space<vmem>>, vector<7x256xf32>
    tpu.vector_store %arg6[%c48_41, %c0_42], %71 {strides = array<i32>} : memref<56x256xf32, #tpu.memory_space<vmem>>, vector<7x256xf32>,
    %c0_43 = arith.constant 0 : index
    %c0_44 = arith.constant 0 : index
    %73 = vector.load %arg6[%c0_43, %c0_44] : memref<56x256xf32, #tpu.memory_space<vmem>>, vector<56x256xf32>
    "tpu.trace_start"() <{level = 10 : i32, message = "ch,ph->cp"}> : () -> ()
    %cst_45 = arith.constant dense<0.000000e+00> : vector<4x56xf32>
    %74 = tpu.matmul %1, %73, %cst_45 {dimension_numbers = #tpu.dot_dimension_numbers<[1], [1], [0], [0], [0, 0, 1, 0], [], []>} : vector<4x256xf32>, vector<56x256xf32>, vector<4x56xf32> -> vector<4x56xf32>
    "tpu.trace_stop"() : () -> ()
    %c1_46 = arith.constant 1 : index
    %c0_47 = arith.constant 0 : index
    %c0_48 = arith.constant 0 : index
    %75 = vector.load %arg5[%c1_46, %c0_47, %c0_48] : memref<8x4x56xf32, #tpu.memory_space<vmem>>, vector<1x4x56xf32>
    %76 = vector.shape_cast %75 : vector<1x4x56xf32> to vector<4x56xf32>
    %77 = vector.shape_cast %74 : vector<4x56xf32> to vector<1x4x56xf32>
    tpu.vector_store %arg5[%c1_46, %c0_47, %c0_48], %77 {strides = array<i32>} : memref<8x4x56xf32, #tpu.memory_space<vmem>>, vector<1x4x56xf32>,
    %c2 = arith.constant 2 : index
    %c0_49 = arith.constant 0 : index
    %c0_50 = arith.constant 0 : index
    %78 = vector.load %arg2[%c2, %c0_49, %c0_50] : memref<8x7x256xf32, #tpu.memory_space<vmem>>, vector<1x7x256xf32>
    %79 = vector.shape_cast %78 : vector<1x7x256xf32> to vector<7x256xf32>
    %c2_51 = arith.constant 2 : index
    %c0_52 = arith.constant 0 : index
    %c0_53 = arith.constant 0 : index
    %80 = vector.load %arg3[%c2_51, %c0_52, %c0_53] : memref<8x7x256xf32, #tpu.memory_space<vmem>>, vector<1x7x256xf32>
    %81 = vector.shape_cast %80 : vector<1x7x256xf32> to vector<7x256xf32>
    %82 = vector.extract_strided_slice %79 {offsets = [0, 0], sizes = [1, 256], strides = [1, 1]} : vector<7x256xf32> to vector<1x256xf32>
    %83 = vector.broadcast %82 : vector<1x256xf32> to vector<7x256xf32>
    %84 = arith.mulf %83, %81 : vector<7x256xf32>
    %c0_54 = arith.constant 0 : index
    %c0_55 = arith.constant 0 : index
    %85 = vector.load %arg6[%c0_54, %c0_55] : memref<56x256xf32, #tpu.memory_space<vmem>>, vector<7x256xf32>
    tpu.vector_store %arg6[%c0_54, %c0_55], %84 {strides = array<i32>} : memref<56x256xf32, #tpu.memory_space<vmem>>, vector<7x256xf32>,
    %86 = vector.extract_strided_slice %79 {offsets = [1, 0], sizes = [1, 256], strides = [1, 1]} : vector<7x256xf32> to vector<1x256xf32>
    %87 = vector.broadcast %86 : vector<1x256xf32> to vector<7x256xf32>
    %88 = arith.mulf %87, %81 : vector<7x256xf32>
    %c8_56 = arith.constant 8 : index
    %c0_57 = arith.constant 0 : index
    %89 = vector.load %arg6[%c8_56, %c0_57] : memref<56x256xf32, #tpu.memory_space<vmem>>, vector<7x256xf32>
    tpu.vector_store %arg6[%c8_56, %c0_57], %88 {strides = array<i32>} : memref<56x256xf32, #tpu.memory_space<vmem>>, vector<7x256xf32>,
    %90 = vector.extract_strided_slice %79 {offsets = [2, 0], sizes = [1, 256], strides = [1, 1]} : vector<7x256xf32> to vector<1x256xf32>
    %91 = vector.broadcast %90 : vector<1x256xf32> to vector<7x256xf32>
    %92 = arith.mulf %91, %81 : vector<7x256xf32>
    %c16_58 = arith.constant 16 : index
    %c0_59 = arith.constant 0 : index
    %93 = vector.load %arg6[%c16_58, %c0_59] : memref<56x256xf32, #tpu.memory_space<vmem>>, vector<7x256xf32>
    tpu.vector_store %arg6[%c16_58, %c0_59], %92 {strides = array<i32>} : memref<56x256xf32, #tpu.memory_space<vmem>>, vector<7x256xf32>,
    %94 = vector.extract_strided_slice %79 {offsets = [3, 0], sizes = [1, 256], strides = [1, 1]} : vector<7x256xf32> to vector<1x256xf32>
    %95 = vector.broadcast %94 : vector<1x256xf32> to vector<7x256xf32>
    %96 = arith.mulf %95, %81 : vector<7x256xf32>
    %c24_60 = arith.constant 24 : index
    %c0_61 = arith.constant 0 : index
    %97 = vector.load %arg6[%c24_60, %c0_61] : memref<56x256xf32, #tpu.memory_space<vmem>>, vector<7x256xf32>
    tpu.vector_store %arg6[%c24_60, %c0_61], %96 {strides = array<i32>} : memref<56x256xf32, #tpu.memory_space<vmem>>, vector<7x256xf32>,
    %98 = vector.extract_strided_slice %79 {offsets = [4, 0], sizes = [1, 256], strides = [1, 1]} : vector<7x256xf32> to vector<1x256xf32>
    %99 = vector.broadcast %98 : vector<1x256xf32> to vector<7x256xf32>
    %100 = arith.mulf %99, %81 : vector<7x256xf32>
    %c32_62 = arith.constant 32 : index
    %c0_63 = arith.constant 0 : index
    %101 = vector.load %arg6[%c32_62, %c0_63] : memref<56x256xf32, #tpu.memory_space<vmem>>, vector<7x256xf32>
    tpu.vector_store %arg6[%c32_62, %c0_63], %100 {strides = array<i32>} : memref<56x256xf32, #tpu.memory_space<vmem>>, vector<7x256xf32>,
    %102 = vector.extract_strided_slice %79 {offsets = [5, 0], sizes = [1, 256], strides = [1, 1]} : vector<7x256xf32> to vector<1x256xf32>
    %103 = vector.broadcast %102 : vector<1x256xf32> to vector<7x256xf32>
    %104 = arith.mulf %103, %81 : vector<7x256xf32>
    %c40_64 = arith.constant 40 : index
    %c0_65 = arith.constant 0 : index
    %105 = vector.load %arg6[%c40_64, %c0_65] : memref<56x256xf32, #tpu.memory_space<vmem>>, vector<7x256xf32>
    tpu.vector_store %arg6[%c40_64, %c0_65], %104 {strides = array<i32>} : memref<56x256xf32, #tpu.memory_space<vmem>>, vector<7x256xf32>,
    %106 = vector.extract_strided_slice %79 {offsets = [6, 0], sizes = [1, 256], strides = [1, 1]} : vector<7x256xf32> to vector<1x256xf32>
    %107 = vector.broadcast %106 : vector<1x256xf32> to vector<7x256xf32>
    %108 = arith.mulf %107, %81 : vector<7x256xf32>
    %c48_66 = arith.constant 48 : index
    %c0_67 = arith.constant 0 : index
    %109 = vector.load %arg6[%c48_66, %c0_67] : memref<56x256xf32, #tpu.memory_space<vmem>>, vector<7x256xf32>
    tpu.vector_store %arg6[%c48_66, %c0_67], %108 {strides = array<i32>} : memref<56x256xf32, #tpu.memory_space<vmem>>, vector<7x256xf32>,
    %c0_68 = arith.constant 0 : index
    %c0_69 = arith.constant 0 : index
    %110 = vector.load %arg6[%c0_68, %c0_69] : memref<56x256xf32, #tpu.memory_space<vmem>>, vector<56x256xf32>
    "tpu.trace_start"() <{level = 10 : i32, message = "ch,ph->cp"}> : () -> ()
    %cst_70 = arith.constant dense<0.000000e+00> : vector<4x56xf32>
    %111 = tpu.matmul %1, %110, %cst_70 {dimension_numbers = #tpu.dot_dimension_numbers<[1], [1], [0], [0], [0, 0, 1, 0], [], []>} : vector<4x256xf32>, vector<56x256xf32>, vector<4x56xf32> -> vector<4x56xf32>
    "tpu.trace_stop"() : () -> ()
    %c2_71 = arith.constant 2 : index
    %c0_72 = arith.constant 0 : index
    %c0_73 = arith.constant 0 : index
    %112 = vector.load %arg5[%c2_71, %c0_72, %c0_73] : memref<8x4x56xf32, #tpu.memory_space<vmem>>, vector<1x4x56xf32>
    %113 = vector.shape_cast %112 : vector<1x4x56xf32> to vector<4x56xf32>
    %114 = vector.shape_cast %111 : vector<4x56xf32> to vector<1x4x56xf32>
    tpu.vector_store %arg5[%c2_71, %c0_72, %c0_73], %114 {strides = array<i32>} : memref<8x4x56xf32, #tpu.memory_space<vmem>>, vector<1x4x56xf32>,
    %c3 = arith.constant 3 : index
    %c0_74 = arith.constant 0 : index
    %c0_75 = arith.constant 0 : index
    %115 = vector.load %arg2[%c3, %c0_74, %c0_75] : memref<8x7x256xf32, #tpu.memory_space<vmem>>, vector<1x7x256xf32>
    %116 = vector.shape_cast %115 : vector<1x7x256xf32> to vector<7x256xf32>
    %c3_76 = arith.constant 3 : index
    %c0_77 = arith.constant 0 : index
    %c0_78 = arith.constant 0 : index
    %117 = vector.load %arg3[%c3_76, %c0_77, %c0_78] : memref<8x7x256xf32, #tpu.memory_space<vmem>>, vector<1x7x256xf32>
    %118 = vector.shape_cast %117 : vector<1x7x256xf32> to vector<7x256xf32>
    %119 = vector.extract_strided_slice %116 {offsets = [0, 0], sizes = [1, 256], strides = [1, 1]} : vector<7x256xf32> to vector<1x256xf32>
    %120 = vector.broadcast %119 : vector<1x256xf32> to vector<7x256xf32>
    %121 = arith.mulf %120, %118 : vector<7x256xf32>
    %c0_79 = arith.constant 0 : index
    %c0_80 = arith.constant 0 : index
    %122 = vector.load %arg6[%c0_79, %c0_80] : memref<56x256xf32, #tpu.memory_space<vmem>>, vector<7x256xf32>
    tpu.vector_store %arg6[%c0_79, %c0_80], %121 {strides = array<i32>} : memref<56x256xf32, #tpu.memory_space<vmem>>, vector<7x256xf32>,
    %123 = vector.extract_strided_slice %116 {offsets = [1, 0], sizes = [1, 256], strides = [1, 1]} : vector<7x256xf32> to vector<1x256xf32>
    %124 = vector.broadcast %123 : vector<1x256xf32> to vector<7x256xf32>
    %125 = arith.mulf %124, %118 : vector<7x256xf32>
    %c8_81 = arith.constant 8 : index
    %c0_82 = arith.constant 0 : index
    %126 = vector.load %arg6[%c8_81, %c0_82] : memref<56x256xf32, #tpu.memory_space<vmem>>, vector<7x256xf32>
    tpu.vector_store %arg6[%c8_81, %c0_82], %125 {strides = array<i32>} : memref<56x256xf32, #tpu.memory_space<vmem>>, vector<7x256xf32>,
    %127 = vector.extract_strided_slice %116 {offsets = [2, 0], sizes = [1, 256], strides = [1, 1]} : vector<7x256xf32> to vector<1x256xf32>
    %128 = vector.broadcast %127 : vector<1x256xf32> to vector<7x256xf32>
    %129 = arith.mulf %128, %118 : vector<7x256xf32>
    %c16_83 = arith.constant 16 : index
    %c0_84 = arith.constant 0 : index
    %130 = vector.load %arg6[%c16_83, %c0_84] : memref<56x256xf32, #tpu.memory_space<vmem>>, vector<7x256xf32>
    tpu.vector_store %arg6[%c16_83, %c0_84], %129 {strides = array<i32>} : memref<56x256xf32, #tpu.memory_space<vmem>>, vector<7x256xf32>,
    %131 = vector.extract_strided_slice %116 {offsets = [3, 0], sizes = [1, 256], strides = [1, 1]} : vector<7x256xf32> to vector<1x256xf32>
    %132 = vector.broadcast %131 : vector<1x256xf32> to vector<7x256xf32>
    %133 = arith.mulf %132, %118 : vector<7x256xf32>
    %c24_85 = arith.constant 24 : index
    %c0_86 = arith.constant 0 : index
    %134 = vector.load %arg6[%c24_85, %c0_86] : memref<56x256xf32, #tpu.memory_space<vmem>>, vector<7x256xf32>
    tpu.vector_store %arg6[%c24_85, %c0_86], %133 {strides = array<i32>} : memref<56x256xf32, #tpu.memory_space<vmem>>, vector<7x256xf32>,
    %135 = vector.extract_strided_slice %116 {offsets = [4, 0], sizes = [1, 256], strides = [1, 1]} : vector<7x256xf32> to vector<1x256xf32>
    %136 = vector.broadcast %135 : vector<1x256xf32> to vector<7x256xf32>
    %137 = arith.mulf %136, %118 : vector<7x256xf32>
    %c32_87 = arith.constant 32 : index
    %c0_88 = arith.constant 0 : index
    %138 = vector.load %arg6[%c32_87, %c0_88] : memref<56x256xf32, #tpu.memory_space<vmem>>, vector<7x256xf32>
    tpu.vector_store %arg6[%c32_87, %c0_88], %137 {strides = array<i32>} : memref<56x256xf32, #tpu.memory_space<vmem>>, vector<7x256xf32>,
    %139 = vector.extract_strided_slice %116 {offsets = [5, 0], sizes = [1, 256], strides = [1, 1]} : vector<7x256xf32> to vector<1x256xf32>
    %140 = vector.broadcast %139 : vector<1x256xf32> to vector<7x256xf32>
    %141 = arith.mulf %140, %118 : vector<7x256xf32>
    %c40_89 = arith.constant 40 : index
    %c0_90 = arith.constant 0 : index
    %142 = vector.load %arg6[%c40_89, %c0_90] : memref<56x256xf32, #tpu.memory_space<vmem>>, vector<7x256xf32>
    tpu.vector_store %arg6[%c40_89, %c0_90], %141 {strides = array<i32>} : memref<56x256xf32, #tpu.memory_space<vmem>>, vector<7x256xf32>,
    %143 = vector.extract_strided_slice %116 {offsets = [6, 0], sizes = [1, 256], strides = [1, 1]} : vector<7x256xf32> to vector<1x256xf32>
    %144 = vector.broadcast %143 : vector<1x256xf32> to vector<7x256xf32>
    %145 = arith.mulf %144, %118 : vector<7x256xf32>
    %c48_91 = arith.constant 48 : index
    %c0_92 = arith.constant 0 : index
    %146 = vector.load %arg6[%c48_91, %c0_92] : memref<56x256xf32, #tpu.memory_space<vmem>>, vector<7x256xf32>
    tpu.vector_store %arg6[%c48_91, %c0_92], %145 {strides = array<i32>} : memref<56x256xf32, #tpu.memory_space<vmem>>, vector<7x256xf32>,
    %c0_93 = arith.constant 0 : index
    %c0_94 = arith.constant 0 : index
    %147 = vector.load %arg6[%c0_93, %c0_94] : memref<56x256xf32, #tpu.memory_space<vmem>>, vector<56x256xf32>
    "tpu.trace_start"() <{level = 10 : i32, message = "ch,ph->cp"}> : () -> ()
    %cst_95 = arith.constant dense<0.000000e+00> : vector<4x56xf32>
    %148 = tpu.matmul %1, %147, %cst_95 {dimension_numbers = #tpu.dot_dimension_numbers<[1], [1], [0], [0], [0, 0, 1, 0], [], []>} : vector<4x256xf32>, vector<56x256xf32>, vector<4x56xf32> -> vector<4x56xf32>
    "tpu.trace_stop"() : () -> ()
    %c3_96 = arith.constant 3 : index
    %c0_97 = arith.constant 0 : index
    %c0_98 = arith.constant 0 : index
    %149 = vector.load %arg5[%c3_96, %c0_97, %c0_98] : memref<8x4x56xf32, #tpu.memory_space<vmem>>, vector<1x4x56xf32>
    %150 = vector.shape_cast %149 : vector<1x4x56xf32> to vector<4x56xf32>
    %151 = vector.shape_cast %148 : vector<4x56xf32> to vector<1x4x56xf32>
    tpu.vector_store %arg5[%c3_96, %c0_97, %c0_98], %151 {strides = array<i32>} : memref<8x4x56xf32, #tpu.memory_space<vmem>>, vector<1x4x56xf32>,
    %c4 = arith.constant 4 : index
    %c0_99 = arith.constant 0 : index
    %c0_100 = arith.constant 0 : index
    %152 = vector.load %arg2[%c4, %c0_99, %c0_100] : memref<8x7x256xf32, #tpu.memory_space<vmem>>, vector<1x7x256xf32>
    %153 = vector.shape_cast %152 : vector<1x7x256xf32> to vector<7x256xf32>
    %c4_101 = arith.constant 4 : index
    %c0_102 = arith.constant 0 : index
    %c0_103 = arith.constant 0 : index
    %154 = vector.load %arg3[%c4_101, %c0_102, %c0_103] : memref<8x7x256xf32, #tpu.memory_space<vmem>>, vector<1x7x256xf32>
    %155 = vector.shape_cast %154 : vector<1x7x256xf32> to vector<7x256xf32>
    %156 = vector.extract_strided_slice %153 {offsets = [0, 0], sizes = [1, 256], strides = [1, 1]} : vector<7x256xf32> to vector<1x256xf32>
    %157 = vector.broadcast %156 : vector<1x256xf32> to vector<7x256xf32>
    %158 = arith.mulf %157, %155 : vector<7x256xf32>
    %c0_104 = arith.constant 0 : index
    %c0_105 = arith.constant 0 : index
    %159 = vector.load %arg6[%c0_104, %c0_105] : memref<56x256xf32, #tpu.memory_space<vmem>>, vector<7x256xf32>
    tpu.vector_store %arg6[%c0_104, %c0_105], %158 {strides = array<i32>} : memref<56x256xf32, #tpu.memory_space<vmem>>, vector<7x256xf32>,
    %160 = vector.extract_strided_slice %153 {offsets = [1, 0], sizes = [1, 256], strides = [1, 1]} : vector<7x256xf32> to vector<1x256xf32>
    %161 = vector.broadcast %160 : vector<1x256xf32> to vector<7x256xf32>
    %162 = arith.mulf %161, %155 : vector<7x256xf32>
    %c8_106 = arith.constant 8 : index
    %c0_107 = arith.constant 0 : index
    %163 = vector.load %arg6[%c8_106, %c0_107] : memref<56x256xf32, #tpu.memory_space<vmem>>, vector<7x256xf32>
    tpu.vector_store %arg6[%c8_106, %c0_107], %162 {strides = array<i32>} : memref<56x256xf32, #tpu.memory_space<vmem>>, vector<7x256xf32>,
    %164 = vector.extract_strided_slice %153 {offsets = [2, 0], sizes = [1, 256], strides = [1, 1]} : vector<7x256xf32> to vector<1x256xf32>
    %165 = vector.broadcast %164 : vector<1x256xf32> to vector<7x256xf32>
    %166 = arith.mulf %165, %155 : vector<7x256xf32>
    %c16_108 = arith.constant 16 : index
    %c0_109 = arith.constant 0 : index
    %167 = vector.load %arg6[%c16_108, %c0_109] : memref<56x256xf32, #tpu.memory_space<vmem>>, vector<7x256xf32>
    tpu.vector_store %arg6[%c16_108, %c0_109], %166 {strides = array<i32>} : memref<56x256xf32, #tpu.memory_space<vmem>>, vector<7x256xf32>,
    %168 = vector.extract_strided_slice %153 {offsets = [3, 0], sizes = [1, 256], strides = [1, 1]} : vector<7x256xf32> to vector<1x256xf32>
    %169 = vector.broadcast %168 : vector<1x256xf32> to vector<7x256xf32>
    %170 = arith.mulf %169, %155 : vector<7x256xf32>
    %c24_110 = arith.constant 24 : index
    %c0_111 = arith.constant 0 : index
    %171 = vector.load %arg6[%c24_110, %c0_111] : memref<56x256xf32, #tpu.memory_space<vmem>>, vector<7x256xf32>
    tpu.vector_store %arg6[%c24_110, %c0_111], %170 {strides = array<i32>} : memref<56x256xf32, #tpu.memory_space<vmem>>, vector<7x256xf32>,
    %172 = vector.extract_strided_slice %153 {offsets = [4, 0], sizes = [1, 256], strides = [1, 1]} : vector<7x256xf32> to vector<1x256xf32>
    %173 = vector.broadcast %172 : vector<1x256xf32> to vector<7x256xf32>
    %174 = arith.mulf %173, %155 : vector<7x256xf32>
    %c32_112 = arith.constant 32 : index
    %c0_113 = arith.constant 0 : index
    %175 = vector.load %arg6[%c32_112, %c0_113] : memref<56x256xf32, #tpu.memory_space<vmem>>, vector<7x256xf32>
    tpu.vector_store %arg6[%c32_112, %c0_113], %174 {strides = array<i32>} : memref<56x256xf32, #tpu.memory_space<vmem>>, vector<7x256xf32>,
    %176 = vector.extract_strided_slice %153 {offsets = [5, 0], sizes = [1, 256], strides = [1, 1]} : vector<7x256xf32> to vector<1x256xf32>
    %177 = vector.broadcast %176 : vector<1x256xf32> to vector<7x256xf32>
    %178 = arith.mulf %177, %155 : vector<7x256xf32>
    %c40_114 = arith.constant 40 : index
    %c0_115 = arith.constant 0 : index
    %179 = vector.load %arg6[%c40_114, %c0_115] : memref<56x256xf32, #tpu.memory_space<vmem>>, vector<7x256xf32>
    tpu.vector_store %arg6[%c40_114, %c0_115], %178 {strides = array<i32>} : memref<56x256xf32, #tpu.memory_space<vmem>>, vector<7x256xf32>,
    %180 = vector.extract_strided_slice %153 {offsets = [6, 0], sizes = [1, 256], strides = [1, 1]} : vector<7x256xf32> to vector<1x256xf32>
    %181 = vector.broadcast %180 : vector<1x256xf32> to vector<7x256xf32>
    %182 = arith.mulf %181, %155 : vector<7x256xf32>
    %c48_116 = arith.constant 48 : index
    %c0_117 = arith.constant 0 : index
    %183 = vector.load %arg6[%c48_116, %c0_117] : memref<56x256xf32, #tpu.memory_space<vmem>>, vector<7x256xf32>
    tpu.vector_store %arg6[%c48_116, %c0_117], %182 {strides = array<i32>} : memref<56x256xf32, #tpu.memory_space<vmem>>, vector<7x256xf32>,
    %c0_118 = arith.constant 0 : index
    %c0_119 = arith.constant 0 : index
    %184 = vector.load %arg6[%c0_118, %c0_119] : memref<56x256xf32, #tpu.memory_space<vmem>>, vector<56x256xf32>
    "tpu.trace_start"() <{level = 10 : i32, message = "ch,ph->cp"}> : () -> ()
    %cst_120 = arith.constant dense<0.000000e+00> : vector<4x56xf32>
    %185 = tpu.matmul %1, %184, %cst_120 {dimension_numbers = #tpu.dot_dimension_numbers<[1], [1], [0], [0], [0, 0, 1, 0], [], []>} : vector<4x256xf32>, vector<56x256xf32>, vector<4x56xf32> -> vector<4x56xf32>
    "tpu.trace_stop"() : () -> ()
    %c4_121 = arith.constant 4 : index
    %c0_122 = arith.constant 0 : index
    %c0_123 = arith.constant 0 : index
    %186 = vector.load %arg5[%c4_121, %c0_122, %c0_123] : memref<8x4x56xf32, #tpu.memory_space<vmem>>, vector<1x4x56xf32>
    %187 = vector.shape_cast %186 : vector<1x4x56xf32> to vector<4x56xf32>
    %188 = vector.shape_cast %185 : vector<4x56xf32> to vector<1x4x56xf32>
    tpu.vector_store %arg5[%c4_121, %c0_122, %c0_123], %188 {strides = array<i32>} : memref<8x4x56xf32, #tpu.memory_space<vmem>>, vector<1x4x56xf32>,
    %c5 = arith.constant 5 : index
    %c0_124 = arith.constant 0 : index
    %c0_125 = arith.constant 0 : index
    %189 = vector.load %arg2[%c5, %c0_124, %c0_125] : memref<8x7x256xf32, #tpu.memory_space<vmem>>, vector<1x7x256xf32>
    %190 = vector.shape_cast %189 : vector<1x7x256xf32> to vector<7x256xf32>
    %c5_126 = arith.constant 5 : index
    %c0_127 = arith.constant 0 : index
    %c0_128 = arith.constant 0 : index
    %191 = vector.load %arg3[%c5_126, %c0_127, %c0_128] : memref<8x7x256xf32, #tpu.memory_space<vmem>>, vector<1x7x256xf32>
    %192 = vector.shape_cast %191 : vector<1x7x256xf32> to vector<7x256xf32>
    %193 = vector.extract_strided_slice %190 {offsets = [0, 0], sizes = [1, 256], strides = [1, 1]} : vector<7x256xf32> to vector<1x256xf32>
    %194 = vector.broadcast %193 : vector<1x256xf32> to vector<7x256xf32>
    %195 = arith.mulf %194, %192 : vector<7x256xf32>
    %c0_129 = arith.constant 0 : index
    %c0_130 = arith.constant 0 : index
    %196 = vector.load %arg6[%c0_129, %c0_130] : memref<56x256xf32, #tpu.memory_space<vmem>>, vector<7x256xf32>
    tpu.vector_store %arg6[%c0_129, %c0_130], %195 {strides = array<i32>} : memref<56x256xf32, #tpu.memory_space<vmem>>, vector<7x256xf32>,
    %197 = vector.extract_strided_slice %190 {offsets = [1, 0], sizes = [1, 256], strides = [1, 1]} : vector<7x256xf32> to vector<1x256xf32>
    %198 = vector.broadcast %197 : vector<1x256xf32> to vector<7x256xf32>
    %199 = arith.mulf %198, %192 : vector<7x256xf32>
    %c8_131 = arith.constant 8 : index
    %c0_132 = arith.constant 0 : index
    %200 = vector.load %arg6[%c8_131, %c0_132] : memref<56x256xf32, #tpu.memory_space<vmem>>, vector<7x256xf32>
    tpu.vector_store %arg6[%c8_131, %c0_132], %199 {strides = array<i32>} : memref<56x256xf32, #tpu.memory_space<vmem>>, vector<7x256xf32>,
    %201 = vector.extract_strided_slice %190 {offsets = [2, 0], sizes = [1, 256], strides = [1, 1]} : vector<7x256xf32> to vector<1x256xf32>
    %202 = vector.broadcast %201 : vector<1x256xf32> to vector<7x256xf32>
    %203 = arith.mulf %202, %192 : vector<7x256xf32>
    %c16_133 = arith.constant 16 : index
    %c0_134 = arith.constant 0 : index
    %204 = vector.load %arg6[%c16_133, %c0_134] : memref<56x256xf32, #tpu.memory_space<vmem>>, vector<7x256xf32>
    tpu.vector_store %arg6[%c16_133, %c0_134], %203 {strides = array<i32>} : memref<56x256xf32, #tpu.memory_space<vmem>>, vector<7x256xf32>,
    %205 = vector.extract_strided_slice %190 {offsets = [3, 0], sizes = [1, 256], strides = [1, 1]} : vector<7x256xf32> to vector<1x256xf32>
    %206 = vector.broadcast %205 : vector<1x256xf32> to vector<7x256xf32>
    %207 = arith.mulf %206, %192 : vector<7x256xf32>
    %c24_135 = arith.constant 24 : index
    %c0_136 = arith.constant 0 : index
    %208 = vector.load %arg6[%c24_135, %c0_136] : memref<56x256xf32, #tpu.memory_space<vmem>>, vector<7x256xf32>
    tpu.vector_store %arg6[%c24_135, %c0_136], %207 {strides = array<i32>} : memref<56x256xf32, #tpu.memory_space<vmem>>, vector<7x256xf32>,
    %209 = vector.extract_strided_slice %190 {offsets = [4, 0], sizes = [1, 256], strides = [1, 1]} : vector<7x256xf32> to vector<1x256xf32>
    %210 = vector.broadcast %209 : vector<1x256xf32> to vector<7x256xf32>
    %211 = arith.mulf %210, %192 : vector<7x256xf32>
    %c32_137 = arith.constant 32 : index
    %c0_138 = arith.constant 0 : index
    %212 = vector.load %arg6[%c32_137, %c0_138] : memref<56x256xf32, #tpu.memory_space<vmem>>, vector<7x256xf32>
    tpu.vector_store %arg6[%c32_137, %c0_138], %211 {strides = array<i32>} : memref<56x256xf32, #tpu.memory_space<vmem>>, vector<7x256xf32>,
    %213 = vector.extract_strided_slice %190 {offsets = [5, 0], sizes = [1, 256], strides = [1, 1]} : vector<7x256xf32> to vector<1x256xf32>
    %214 = vector.broadcast %213 : vector<1x256xf32> to vector<7x256xf32>
    %215 = arith.mulf %214, %192 : vector<7x256xf32>
    %c40_139 = arith.constant 40 : index
    %c0_140 = arith.constant 0 : index
    %216 = vector.load %arg6[%c40_139, %c0_140] : memref<56x256xf32, #tpu.memory_space<vmem>>, vector<7x256xf32>
    tpu.vector_store %arg6[%c40_139, %c0_140], %215 {strides = array<i32>} : memref<56x256xf32, #tpu.memory_space<vmem>>, vector<7x256xf32>,
    %217 = vector.extract_strided_slice %190 {offsets = [6, 0], sizes = [1, 256], strides = [1, 1]} : vector<7x256xf32> to vector<1x256xf32>
    %218 = vector.broadcast %217 : vector<1x256xf32> to vector<7x256xf32>
    %219 = arith.mulf %218, %192 : vector<7x256xf32>
    %c48_141 = arith.constant 48 : index
    %c0_142 = arith.constant 0 : index
    %220 = vector.load %arg6[%c48_141, %c0_142] : memref<56x256xf32, #tpu.memory_space<vmem>>, vector<7x256xf32>
    tpu.vector_store %arg6[%c48_141, %c0_142], %219 {strides = array<i32>} : memref<56x256xf32, #tpu.memory_space<vmem>>, vector<7x256xf32>,
    %c0_143 = arith.constant 0 : index
    %c0_144 = arith.constant 0 : index
    %221 = vector.load %arg6[%c0_143, %c0_144] : memref<56x256xf32, #tpu.memory_space<vmem>>, vector<56x256xf32>
    "tpu.trace_start"() <{level = 10 : i32, message = "ch,ph->cp"}> : () -> ()
    %cst_145 = arith.constant dense<0.000000e+00> : vector<4x56xf32>
    %222 = tpu.matmul %1, %221, %cst_145 {dimension_numbers = #tpu.dot_dimension_numbers<[1], [1], [0], [0], [0, 0, 1, 0], [], []>} : vector<4x256xf32>, vector<56x256xf32>, vector<4x56xf32> -> vector<4x56xf32>
    "tpu.trace_stop"() : () -> ()
    %c5_146 = arith.constant 5 : index
    %c0_147 = arith.constant 0 : index
    %c0_148 = arith.constant 0 : index
    %223 = vector.load %arg5[%c5_146, %c0_147, %c0_148] : memref<8x4x56xf32, #tpu.memory_space<vmem>>, vector<1x4x56xf32>
    %224 = vector.shape_cast %223 : vector<1x4x56xf32> to vector<4x56xf32>
    %225 = vector.shape_cast %222 : vector<4x56xf32> to vector<1x4x56xf32>
    tpu.vector_store %arg5[%c5_146, %c0_147, %c0_148], %225 {strides = array<i32>} : memref<8x4x56xf32, #tpu.memory_space<vmem>>, vector<1x4x56xf32>,
    %c6 = arith.constant 6 : index
    %c0_149 = arith.constant 0 : index
    %c0_150 = arith.constant 0 : index
    %226 = vector.load %arg2[%c6, %c0_149, %c0_150] : memref<8x7x256xf32, #tpu.memory_space<vmem>>, vector<1x7x256xf32>
    %227 = vector.shape_cast %226 : vector<1x7x256xf32> to vector<7x256xf32>
    %c6_151 = arith.constant 6 : index
    %c0_152 = arith.constant 0 : index
    %c0_153 = arith.constant 0 : index
    %228 = vector.load %arg3[%c6_151, %c0_152, %c0_153] : memref<8x7x256xf32, #tpu.memory_space<vmem>>, vector<1x7x256xf32>
    %229 = vector.shape_cast %228 : vector<1x7x256xf32> to vector<7x256xf32>
    %230 = vector.extract_strided_slice %227 {offsets = [0, 0], sizes = [1, 256], strides = [1, 1]} : vector<7x256xf32> to vector<1x256xf32>
    %231 = vector.broadcast %230 : vector<1x256xf32> to vector<7x256xf32>
    %232 = arith.mulf %231, %229 : vector<7x256xf32>
    %c0_154 = arith.constant 0 : index
    %c0_155 = arith.constant 0 : index
    %233 = vector.load %arg6[%c0_154, %c0_155] : memref<56x256xf32, #tpu.memory_space<vmem>>, vector<7x256xf32>
    tpu.vector_store %arg6[%c0_154, %c0_155], %232 {strides = array<i32>} : memref<56x256xf32, #tpu.memory_space<vmem>>, vector<7x256xf32>,
    %234 = vector.extract_strided_slice %227 {offsets = [1, 0], sizes = [1, 256], strides = [1, 1]} : vector<7x256xf32> to vector<1x256xf32>
    %235 = vector.broadcast %234 : vector<1x256xf32> to vector<7x256xf32>
    %236 = arith.mulf %235, %229 : vector<7x256xf32>
    %c8_156 = arith.constant 8 : index
    %c0_157 = arith.constant 0 : index
    %237 = vector.load %arg6[%c8_156, %c0_157] : memref<56x256xf32, #tpu.memory_space<vmem>>, vector<7x256xf32>
    tpu.vector_store %arg6[%c8_156, %c0_157], %236 {strides = array<i32>} : memref<56x256xf32, #tpu.memory_space<vmem>>, vector<7x256xf32>,
    %238 = vector.extract_strided_slice %227 {offsets = [2, 0], sizes = [1, 256], strides = [1, 1]} : vector<7x256xf32> to vector<1x256xf32>
    %239 = vector.broadcast %238 : vector<1x256xf32> to vector<7x256xf32>
    %240 = arith.mulf %239, %229 : vector<7x256xf32>
    %c16_158 = arith.constant 16 : index
    %c0_159 = arith.constant 0 : index
    %241 = vector.load %arg6[%c16_158, %c0_159] : memref<56x256xf32, #tpu.memory_space<vmem>>, vector<7x256xf32>
    tpu.vector_store %arg6[%c16_158, %c0_159], %240 {strides = array<i32>} : memref<56x256xf32, #tpu.memory_space<vmem>>, vector<7x256xf32>,
    %242 = vector.extract_strided_slice %227 {offsets = [3, 0], sizes = [1, 256], strides = [1, 1]} : vector<7x256xf32> to vector<1x256xf32>
    %243 = vector.broadcast %242 : vector<1x256xf32> to vector<7x256xf32>
    %244 = arith.mulf %243, %229 : vector<7x256xf32>
    %c24_160 = arith.constant 24 : index
    %c0_161 = arith.constant 0 : index
    %245 = vector.load %arg6[%c24_160, %c0_161] : memref<56x256xf32, #tpu.memory_space<vmem>>, vector<7x256xf32>
    tpu.vector_store %arg6[%c24_160, %c0_161], %244 {strides = array<i32>} : memref<56x256xf32, #tpu.memory_space<vmem>>, vector<7x256xf32>,
    %246 = vector.extract_strided_slice %227 {offsets = [4, 0], sizes = [1, 256], strides = [1, 1]} : vector<7x256xf32> to vector<1x256xf32>
    %247 = vector.broadcast %246 : vector<1x256xf32> to vector<7x256xf32>
    %248 = arith.mulf %247, %229 : vector<7x256xf32>
    %c32_162 = arith.constant 32 : index
    %c0_163 = arith.constant 0 : index
    %249 = vector.load %arg6[%c32_162, %c0_163] : memref<56x256xf32, #tpu.memory_space<vmem>>, vector<7x256xf32>
    tpu.vector_store %arg6[%c32_162, %c0_163], %248 {strides = array<i32>} : memref<56x256xf32, #tpu.memory_space<vmem>>, vector<7x256xf32>,
    %250 = vector.extract_strided_slice %227 {offsets = [5, 0], sizes = [1, 256], strides = [1, 1]} : vector<7x256xf32> to vector<1x256xf32>
    %251 = vector.broadcast %250 : vector<1x256xf32> to vector<7x256xf32>
    %252 = arith.mulf %251, %229 : vector<7x256xf32>
    %c40_164 = arith.constant 40 : index
    %c0_165 = arith.constant 0 : index
    %253 = vector.load %arg6[%c40_164, %c0_165] : memref<56x256xf32, #tpu.memory_space<vmem>>, vector<7x256xf32>
    tpu.vector_store %arg6[%c40_164, %c0_165], %252 {strides = array<i32>} : memref<56x256xf32, #tpu.memory_space<vmem>>, vector<7x256xf32>,
    %254 = vector.extract_strided_slice %227 {offsets = [6, 0], sizes = [1, 256], strides = [1, 1]} : vector<7x256xf32> to vector<1x256xf32>
    %255 = vector.broadcast %254 : vector<1x256xf32> to vector<7x256xf32>
    %256 = arith.mulf %255, %229 : vector<7x256xf32>
    %c48_166 = arith.constant 48 : index
    %c0_167 = arith.constant 0 : index
    %257 = vector.load %arg6[%c48_166, %c0_167] : memref<56x256xf32, #tpu.memory_space<vmem>>, vector<7x256xf32>
    tpu.vector_store %arg6[%c48_166, %c0_167], %256 {strides = array<i32>} : memref<56x256xf32, #tpu.memory_space<vmem>>, vector<7x256xf32>,
    %c0_168 = arith.constant 0 : index
    %c0_169 = arith.constant 0 : index
    %258 = vector.load %arg6[%c0_168, %c0_169] : memref<56x256xf32, #tpu.memory_space<vmem>>, vector<56x256xf32>
    "tpu.trace_start"() <{level = 10 : i32, message = "ch,ph->cp"}> : () -> ()
    %cst_170 = arith.constant dense<0.000000e+00> : vector<4x56xf32>
    %259 = tpu.matmul %1, %258, %cst_170 {dimension_numbers = #tpu.dot_dimension_numbers<[1], [1], [0], [0], [0, 0, 1, 0], [], []>} : vector<4x256xf32>, vector<56x256xf32>, vector<4x56xf32> -> vector<4x56xf32>
    "tpu.trace_stop"() : () -> ()
    %c6_171 = arith.constant 6 : index
    %c0_172 = arith.constant 0 : index
    %c0_173 = arith.constant 0 : index
    %260 = vector.load %arg5[%c6_171, %c0_172, %c0_173] : memref<8x4x56xf32, #tpu.memory_space<vmem>>, vector<1x4x56xf32>
    %261 = vector.shape_cast %260 : vector<1x4x56xf32> to vector<4x56xf32>
    %262 = vector.shape_cast %259 : vector<4x56xf32> to vector<1x4x56xf32>
    tpu.vector_store %arg5[%c6_171, %c0_172, %c0_173], %262 {strides = array<i32>} : memref<8x4x56xf32, #tpu.memory_space<vmem>>, vector<1x4x56xf32>,
    %c7 = arith.constant 7 : index
    %c0_174 = arith.constant 0 : index
    %c0_175 = arith.constant 0 : index
    %263 = vector.load %arg2[%c7, %c0_174, %c0_175] : memref<8x7x256xf32, #tpu.memory_space<vmem>>, vector<1x7x256xf32>
    %264 = vector.shape_cast %263 : vector<1x7x256xf32> to vector<7x256xf32>
    %c7_176 = arith.constant 7 : index
    %c0_177 = arith.constant 0 : index
    %c0_178 = arith.constant 0 : index
    %265 = vector.load %arg3[%c7_176, %c0_177, %c0_178] : memref<8x7x256xf32, #tpu.memory_space<vmem>>, vector<1x7x256xf32>
    %266 = vector.shape_cast %265 : vector<1x7x256xf32> to vector<7x256xf32>
    %267 = vector.extract_strided_slice %264 {offsets = [0, 0], sizes = [1, 256], strides = [1, 1]} : vector<7x256xf32> to vector<1x256xf32>
    %268 = vector.broadcast %267 : vector<1x256xf32> to vector<7x256xf32>
    %269 = arith.mulf %268, %266 : vector<7x256xf32>
    %c0_179 = arith.constant 0 : index
    %c0_180 = arith.constant 0 : index
    %270 = vector.load %arg6[%c0_179, %c0_180] : memref<56x256xf32, #tpu.memory_space<vmem>>, vector<7x256xf32>
    tpu.vector_store %arg6[%c0_179, %c0_180], %269 {strides = array<i32>} : memref<56x256xf32, #tpu.memory_space<vmem>>, vector<7x256xf32>,
    %271 = vector.extract_strided_slice %264 {offsets = [1, 0], sizes = [1, 256], strides = [1, 1]} : vector<7x256xf32> to vector<1x256xf32>
    %272 = vector.broadcast %271 : vector<1x256xf32> to vector<7x256xf32>
    %273 = arith.mulf %272, %266 : vector<7x256xf32>
    %c8_181 = arith.constant 8 : index
    %c0_182 = arith.constant 0 : index
    %274 = vector.load %arg6[%c8_181, %c0_182] : memref<56x256xf32, #tpu.memory_space<vmem>>, vector<7x256xf32>
    tpu.vector_store %arg6[%c8_181, %c0_182], %273 {strides = array<i32>} : memref<56x256xf32, #tpu.memory_space<vmem>>, vector<7x256xf32>,
    %275 = vector.extract_strided_slice %264 {offsets = [2, 0], sizes = [1, 256], strides = [1, 1]} : vector<7x256xf32> to vector<1x256xf32>
    %276 = vector.broadcast %275 : vector<1x256xf32> to vector<7x256xf32>
    %277 = arith.mulf %276, %266 : vector<7x256xf32>
    %c16_183 = arith.constant 16 : index
    %c0_184 = arith.constant 0 : index
    %278 = vector.load %arg6[%c16_183, %c0_184] : memref<56x256xf32, #tpu.memory_space<vmem>>, vector<7x256xf32>
    tpu.vector_store %arg6[%c16_183, %c0_184], %277 {strides = array<i32>} : memref<56x256xf32, #tpu.memory_space<vmem>>, vector<7x256xf32>,
    %279 = vector.extract_strided_slice %264 {offsets = [3, 0], sizes = [1, 256], strides = [1, 1]} : vector<7x256xf32> to vector<1x256xf32>
    %280 = vector.broadcast %279 : vector<1x256xf32> to vector<7x256xf32>
    %281 = arith.mulf %280, %266 : vector<7x256xf32>
    %c24_185 = arith.constant 24 : index
    %c0_186 = arith.constant 0 : index
    %282 = vector.load %arg6[%c24_185, %c0_186] : memref<56x256xf32, #tpu.memory_space<vmem>>, vector<7x256xf32>
    tpu.vector_store %arg6[%c24_185, %c0_186], %281 {strides = array<i32>} : memref<56x256xf32, #tpu.memory_space<vmem>>, vector<7x256xf32>,
    %283 = vector.extract_strided_slice %264 {offsets = [4, 0], sizes = [1, 256], strides = [1, 1]} : vector<7x256xf32> to vector<1x256xf32>
    %284 = vector.broadcast %283 : vector<1x256xf32> to vector<7x256xf32>
    %285 = arith.mulf %284, %266 : vector<7x256xf32>
    %c32_187 = arith.constant 32 : index
    %c0_188 = arith.constant 0 : index
    %286 = vector.load %arg6[%c32_187, %c0_188] : memref<56x256xf32, #tpu.memory_space<vmem>>, vector<7x256xf32>
    tpu.vector_store %arg6[%c32_187, %c0_188], %285 {strides = array<i32>} : memref<56x256xf32, #tpu.memory_space<vmem>>, vector<7x256xf32>,
    %287 = vector.extract_strided_slice %264 {offsets = [5, 0], sizes = [1, 256], strides = [1, 1]} : vector<7x256xf32> to vector<1x256xf32>
    %288 = vector.broadcast %287 : vector<1x256xf32> to vector<7x256xf32>
    %289 = arith.mulf %288, %266 : vector<7x256xf32>
    %c40_189 = arith.constant 40 : index
    %c0_190 = arith.constant 0 : index
    %290 = vector.load %arg6[%c40_189, %c0_190] : memref<56x256xf32, #tpu.memory_space<vmem>>, vector<7x256xf32>
    tpu.vector_store %arg6[%c40_189, %c0_190], %289 {strides = array<i32>} : memref<56x256xf32, #tpu.memory_space<vmem>>, vector<7x256xf32>,
    %291 = vector.extract_strided_slice %264 {offsets = [6, 0], sizes = [1, 256], strides = [1, 1]} : vector<7x256xf32> to vector<1x256xf32>
    %292 = vector.broadcast %291 : vector<1x256xf32> to vector<7x256xf32>
    %293 = arith.mulf %292, %266 : vector<7x256xf32>
    %c48_191 = arith.constant 48 : index
    %c0_192 = arith.constant 0 : index
    %294 = vector.load %arg6[%c48_191, %c0_192] : memref<56x256xf32, #tpu.memory_space<vmem>>, vector<7x256xf32>
    tpu.vector_store %arg6[%c48_191, %c0_192], %293 {strides = array<i32>} : memref<56x256xf32, #tpu.memory_space<vmem>>, vector<7x256xf32>,
    %c0_193 = arith.constant 0 : index
    %c0_194 = arith.constant 0 : index
    %295 = vector.load %arg6[%c0_193, %c0_194] : memref<56x256xf32, #tpu.memory_space<vmem>>, vector<56x256xf32>
    "tpu.trace_start"() <{level = 10 : i32, message = "ch,ph->cp"}> : () -> ()
    %cst_195 = arith.constant dense<0.000000e+00> : vector<4x56xf32>
    %296 = tpu.matmul %1, %295, %cst_195 {dimension_numbers = #tpu.dot_dimension_numbers<[1], [1], [0], [0], [0, 0, 1, 0], [], []>} : vector<4x256xf32>, vector<56x256xf32>, vector<4x56xf32> -> vector<4x56xf32>
    "tpu.trace_stop"() : () -> ()
    %c7_196 = arith.constant 7 : index
    %c0_197 = arith.constant 0 : index
    %c0_198 = arith.constant 0 : index
    %297 = vector.load %arg5[%c7_196, %c0_197, %c0_198] : memref<8x4x56xf32, #tpu.memory_space<vmem>>, vector<1x4x56xf32>
    %298 = vector.shape_cast %297 : vector<1x4x56xf32> to vector<4x56xf32>
    %299 = vector.shape_cast %296 : vector<4x56xf32> to vector<1x4x56xf32>
    tpu.vector_store %arg5[%c7_196, %c0_197, %c0_198], %299 {strides = array<i32>} : memref<8x4x56xf32, #tpu.memory_space<vmem>>, vector<1x4x56xf32>,
    return
  }
  func.func @transform_0(%arg0: i32, %arg1: memref<2xi32, #tpu.memory_space<smem>>) -> (i32, i32, i32) {
    %c0_i32 = arith.constant 0 : i32
    %c0_i32_0 = arith.constant 0 : i32
    %c0_i32_1 = arith.constant 0 : i32
    return %arg0, %c0_i32, %c0_i32_0 : i32, i32, i32
  }
  func.func @transform_1(%arg0: i32, %arg1: memref<2xi32, #tpu.memory_space<smem>>) -> (i32, i32, i32) {
    %c0_i32 = arith.constant 0 : i32
    %c0_i32_0 = arith.constant 0 : i32
    %c0_i32_1 = arith.constant 0 : i32
    return %arg0, %c0_i32, %c0_i32_0 : i32, i32, i32
  }
  func.func @transform_2(%arg0: i32, %arg1: memref<2xi32, #tpu.memory_space<smem>>) -> (i32, i32, i32) {
    %0 = arith.index_cast %arg0 : i32 to index
    %1 = memref.load %arg1[%0] : memref<2xi32, #tpu.memory_space<smem>>
    %c0_i32 = arith.constant 0 : i32
    %c0_i32_0 = arith.constant 0 : i32
    %c0_i32_1 = arith.constant 0 : i32
    return %1, %c0_i32, %c0_i32_0 : i32, i32, i32
  }
  func.func @transform_3(%arg0: i32, %arg1: memref<2xi32, #tpu.memory_space<smem>>) -> (i32, i32, i32) {
    %c0_i32 = arith.constant 0 : i32
    %c0_i32_0 = arith.constant 0 : i32
    %c0_i32_1 = arith.constant 0 : i32
    return %arg0, %c0_i32, %c0_i32_0 : i32, i32, i32
  }
}

</mosaic_0001>

<llo_original>
// kernel: tpu_custom_call.1
$region0: #{tpu_custom_call.1}
  #allocation0 [shape = 'u32[]', space=smem, size = 0x4, offset = 0x4, fixed_abs, tag = 'smem constant byte address 0x4 - core index']
  #allocation1 [shape = 'u32[144,128]{1,0:T(1,128)}', space=vmem, size = 0x12000, scoped, tag = 'internal scratch']
  #allocation2 [shape = 'f32[56,256]{1,0:T(8,128)}', space=vmem, size = 0xe000, scoped, tag = 'scratch operand']
  #allocation3 [shape = 's32[1]{0}', space=sflag, size = 0x4, scoped, tag = 'scoped memory for tpu_custom_call.1']
  #allocation4 [shape = 'u8[512]{0}', space=smem, size = 0x200, scoped, tag = 'prefetched SMEM operand 0']
  %s0 = inlined_call_operand.vmem [shape: s32[2], index: 0, kind: input, shape index: {}]
  %s1 = inlined_call_operand.vmem [shape: f32[16,7,256], index: 1, kind: input, shape index: {}]
  %s2 = inlined_call_operand.vmem [shape: f32[16,7,256], index: 2, kind: input, shape index: {}]
  %s3 = inlined_call_operand.vmem [shape: f32[2,4,256], index: 3, kind: input, shape index: {}]
  %s4 = inlined_call_operand.hbm [shape: f32[16,4,56], index: 4, kind: output, shape index: {}]
  %s5 = sld [smem:[#allocation0]]
  $region45: #{tpu_custom_call.1} parent=0
    _
  %s7 = ssub.s32 1, %s5
  %s8 = scalar_select 0, %s7, %s5
  %s9 = sshll.u32 %s0, 4
  %s10 = int_to_ptr.vmem [resolvable:$true] %s9
  %12 = dma.vmem_to_smem %s10, 16, [#allocation4], [#allocation3]
  %13 = dma.done [#allocation3], 16
  %14 = sfence
  $region1: #{tpu_custom_call.1} parent=0
    #allocation5 [shape = 'u8[32768]{0}', space=vmem, size = 0x8000, scoped, tag = 'output window, operand 0']
    #allocation6 [shape = 's32[2]{0}', space=sflag, size = 0x8, scoped, tag = 'scoped memory for tpu_custom_call.1']
    %15 = vsyncpa [#allocation6], 0
    %s16 = scalar_lea.sflag [#allocation6], 1
    %17 = vsyncpa %s16, 0
    loop: start=0, step=1, limit=4
    $region2: #{tpu_custom_call.1} parent=1 // loop_pre_header
      _
    $region3: #{tpu_custom_call.1} parent=1 // loop_header
      %s19 = sphi 0, %s23
      %p20 = scmp.ge.s32.totalorder %s19, 4
      %s29 = sphi 0, %s31
      %s32 = sphi 0, %s29
      %s33 = sphi 0, %s32
      %s49 = sphi 0, %s33
      %s55 = sphi 0, %s57
      %s58 = sphi 0, %s55
      %s59 = sphi 0, %s58
      %s75 = sphi 0, %s59
      %s83 = sphi 0, %s85
      %s86 = sphi 0, %s83
      %s87 = sphi 0, %s86
      %s103 = sphi 0, %s87
      %s109 = sphi 0, %s111
      %s112 = sphi 0, %s109
      %s113 = sphi 0, %s112
      %s129 = sphi 0, %s113
    $region4: #{tpu_custom_call.1} parent=1 // loop_header_branch
      %22 = sbr.rel (%p20) target = $region8
    $region5: #{tpu_custom_call.1} parent=1 // loop_body
      %s24 = ssub.s32 %s19, 1
      %s25 = ssub.s32 %s19, 2
      %s26 = sadd.s32 %s19, 1
      %s27 = ssub.s32 %s19, %s26
      %p28 = scmp.eq.s32.totalorder %s27, 0
      %s30 = sadd.s32 %s29, 1
      %s31 = scalar_select %p28, %s29, %s30
      %p34 = pneg %p28
      %p35 = scmp.eq.s32.totalorder %s19, 1
      %p36 = por %p34, %p35
      %p37 = scmp.ne.s32.totalorder %s29, %s32
      %p38 = scmp.eq.s32.totalorder %s19, 0
      %p39 = por %p37, %p38
      %p40 = scmp.ne.s32.totalorder %s29, %s32
      %p41 = scmp.eq.s32.totalorder %s24, 1
      %p42 = por %p40, %p41
      %p43 = scmp.ne.s32.totalorder %s32, %s33
      %p44 = scmp.eq.s32.totalorder %s24, 0
      %p45 = por %p43, %p44
      %p46 = scmp.ne.s32.totalorder %s32, %s33
      %p47 = scmp.eq.s32.totalorder %s25, 1
      %p48 = por %p46, %p47
      %p50 = scmp.ne.s32.totalorder %s33, %s49
      %p51 = scmp.eq.s32.totalorder %s25, 0
      %p52 = por %p50, %p51
      %s53 = ssub.s32 %s19, %s26
      %p54 = scmp.eq.s32.totalorder %s53, 0
      %s56 = sadd.s32 %s55, 1
      %s57 = scalar_select %p54, %s55, %s56
      %p60 = pneg %p54
      %p61 = scmp.eq.s32.totalorder %s19, 1
      %p62 = por %p60, %p61
      %p63 = scmp.ne.s32.totalorder %s55, %s58
      %p64 = scmp.eq.s32.totalorder %s19, 0
      %p65 = por %p63, %p64
      %p66 = scmp.ne.s32.totalorder %s55, %s58
      %p67 = scmp.eq.s32.totalorder %s24, 1
      %p68 = por %p66, %p67
      %p69 = scmp.ne.s32.totalorder %s58, %s59
      %p70 = scmp.eq.s32.totalorder %s24, 0
      %p71 = por %p69, %p70
      %p72 = scmp.ne.s32.totalorder %s58, %s59
      %p73 = scmp.eq.s32.totalorder %s25, 1
      %p74 = por %p72, %p73
      %p76 = scmp.ne.s32.totalorder %s59, %s75
      %p77 = scmp.eq.s32.totalorder %s25, 0
      %p78 = por %p76, %p77
      %s79 = sld [smem:[#allocation4 + %s19]]
      %s80 = sld [smem:[#allocation4 + %s26]]
      %s81 = ssub.s32 %s79, %s80
      %p82 = scmp.eq.s32.totalorder %s81, 0
      %s84 = sadd.s32 %s83, 1
      %s85 = scalar_select %p82, %s83, %s84
      %p88 = pneg %p82
      %p89 = scmp.eq.s32.totalorder %s19, 1
      %p90 = por %p88, %p89
      %p91 = scmp.ne.s32.totalorder %s83, %s86
      %p92 = scmp.eq.s32.totalorder %s19, 0
      %p93 = por %p91, %p92
      %p94 = scmp.ne.s32.totalorder %s83, %s86
      %p95 = scmp.eq.s32.totalorder %s24, 1
      %p96 = por %p94, %p95
      %p97 = scmp.ne.s32.totalorder %s86, %s87
      %p98 = scmp.eq.s32.totalorder %s24, 0
      %p99 = por %p97, %p98
      %p100 = scmp.ne.s32.totalorder %s86, %s87
      %p101 = scmp.eq.s32.totalorder %s25, 1
      %p102 = por %p100, %p101
      %p104 = scmp.ne.s32.totalorder %s87, %s103
      %p105 = scmp.eq.s32.totalorder %s25, 0
      %p106 = por %p104, %p105
      %s107 = ssub.s32 %s19, %s26
      %p108 = scmp.eq.s32.totalorder %s107, 0
      %s110 = sadd.s32 %s109, 1
      %s111 = scalar_select %p108, %s109, %s110
      %p114 = pneg %p108
      %p115 = scmp.eq.s32.totalorder %s19, 1
      %p116 = por %p114, %p115
      %p117 = scmp.ne.s32.totalorder %s109, %s112
      %p118 = scmp.eq.s32.totalorder %s19, 0
      %p119 = por %p117, %p118
      %p120 = scmp.ne.s32.totalorder %s109, %s112
      %p121 = scmp.eq.s32.totalorder %s24, 1
      %p122 = por %p120, %p121
      %p123 = scmp.ne.s32.totalorder %s112, %s113
      %p124 = scmp.eq.s32.totalorder %s24, 0
      %p125 = por %p123, %p124
      %p126 = scmp.ne.s32.totalorder %s112, %s113
      %p127 = scmp.eq.s32.totalorder %s25, 1
      %p128 = por %p126, %p127
      %p130 = scmp.ne.s32.totalorder %s113, %s129
      %p131 = scmp.eq.s32.totalorder %s25, 0
      %p132 = por %p130, %p131
      %p133 = scmp.le.s32.totalorder 1, %s19
      %p134 = scmp.lt.s32.totalorder %s19, 3
      %p135 = pnand %p133, %p134
      %p136 = pneg %p135
      // Predicated region
      $region9: #{tpu_custom_call.1} parent=5 // pred_check
        _
      $region10: #{tpu_custom_call.1} parent=5 // pred_check_branch
        %138 = sbr.rel (%p135) target = $region12
      $region11: #{tpu_custom_call.1} parent=5 // pred_region
        %s139 = ssub.s32 %s19, 1
      $region12: #{tpu_custom_call.1} parent=5 // pred_fallthru
        _
      %p140 = scmp.lt.s32.totalorder %s19, 2
      // Predicated region
      $region13: #{tpu_custom_call.1} parent=5 // pred_check
        %p141 = pneg %p140
      $region14: #{tpu_custom_call.1} parent=5 // pred_check_branch
        %143 = sbr.rel (%p141) target = $region16
      $region15: #{tpu_custom_call.1} parent=5 // pred_region
        // Predicated region
        $region17: #{tpu_custom_call.1} parent=15 // pred_check
          %p144 = pneg %p39
        $region18: #{tpu_custom_call.1} parent=15 // pred_check_branch
          %146 = sbr.rel (%p144) target = $region20
        $region19: #{tpu_custom_call.1} parent=15 // pred_region
          %s147 = smul.u32 8, %s19
          %p148 = scmp.lt.s32.totalorder %s147, 15
          %s149 = scalar_select %p148, %s147, 15
          %s150 = smul.addr %s149, 2
          %s151 = smul.addr %s150, 8
          %s152 = scalar_lea.vmem %s1, %s151
          %s153 = smul.u32 8, %s19
        $region20: #{tpu_custom_call.1} parent=15 // pred_fallthru
          _
        // Predicated region
        $region21: #{tpu_custom_call.1} parent=15 // pred_check
          %p154 = pneg %p65
        $region22: #{tpu_custom_call.1} parent=15 // pred_check_branch
          %156 = sbr.rel (%p154) target = $region24
        $region23: #{tpu_custom_call.1} parent=15 // pred_region
          %s157 = smul.u32 8, %s19
          %p158 = scmp.lt.s32.totalorder %s157, 15
          %s159 = scalar_select %p158, %s157, 15
          %s160 = smul.addr %s159, 2
          %s161 = smul.addr %s160, 8
          %s162 = scalar_lea.vmem %s2, %s161
          %s163 = smul.u32 8, %s19
        $region24: #{tpu_custom_call.1} parent=15 // pred_fallthru
          _
        // Predicated region
        $region25: #{tpu_custom_call.1} parent=15 // pred_check
          %p164 = pneg %p93
        $region26: #{tpu_custom_call.1} parent=15 // pred_check_branch
          %166 = sbr.rel (%p164) target = $region28
        $region27: #{tpu_custom_call.1} parent=15 // pred_region
          %s167 = sld [smem:[#allocation4 + %s19]]
          %p168 = scmp.lt.s32.totalorder %s167, 1
          %s169 = scalar_select %p168, %s167, 1
          %s170 = smul.addr %s169, 2
          %s171 = smul.addr %s170, 4
          %s172 = scalar_lea.vmem %s3, %s171
          %s173 = sld [smem:[#allocation4 + %s19]]
        $region28: #{tpu_custom_call.1} parent=15 // pred_fallthru
          _
      $region16: #{tpu_custom_call.1} parent=5 // pred_fallthru
        _
      %p174 = scmp.le.s32.totalorder 1, %s19
      %p175 = scmp.lt.s32.totalorder %s19, 3
      %p176 = pnand %p174, %p175
      %p177 = pneg %p176
      // Predicated region
      $region29: #{tpu_custom_call.1} parent=5 // pred_check
        _
      $region30: #{tpu_custom_call.1} parent=5 // pred_check_branch
        %179 = sbr.rel (%p176) target = $region32
      $region31: #{tpu_custom_call.1} parent=5 // pred_region
        %s180 = ssub.s32 %s19, 1
        %s181 = smul.u32 8, %s24
        %p182 = scmp.lt.s32.totalorder %s181, 15
        %s183 = scalar_select %p182, %s181, 15
        %s184 = smul.addr %s183, 2
        %s185 = smul.addr %s184, 8
        %s186 = scalar_lea.vmem %s1, %s185
        %p187 = pneg %p45
        %p188 = pneg %p42
        %s189 = smul.u32 8, %s24
        %p190 = scmp.lt.s32.totalorder %s189, 15
        %s191 = scalar_select %p190, %s189, 15
        %s192 = smul.addr %s191, 2
        %s193 = smul.addr %s192, 8
        %s194 = scalar_lea.vmem %s2, %s193
        %p195 = pneg %p71
        %p196 = pneg %p68
        %s197 = sld [smem:[#allocation4 + %s24]]
        %p198 = scmp.lt.s32.totalorder %s197, 1
        %s199 = scalar_select %p198, %s197, 1
        %s200 = smul.addr %s199, 2
        %s201 = smul.addr %s200, 4
        %s202 = scalar_lea.vmem %s3, %s201
        %p203 = pneg %p99
        %p204 = pneg %p96
        %p205 = pneg %p125
        %p206 = pneg %p122
        %s207 = sand.u32 %s112, 1
        %s208 = scalar_lea.sflag [#allocation6], %s207
        %s209 = sand.u32 %s112, 1
        %s210 = smul.addr %s209, 32
        %s211 = scalar_lea.vmem [#allocation5], %s210
        %s212 = smul.u32 8, %s24
        %p213 = scmp.lt.s32.totalorder %s212, 15
        %s214 = scalar_select %p213, %s212, 15
        %s215 = smul.addr %s214, 2
        %s216 = smul.addr %s215, 8
        %s217 = scalar_lea.vmem %s1, %s216
        %s218 = smul.u32 8, %s24
        %s219 = smul.u32 8, %s24
        %p220 = scmp.lt.s32.totalorder %s219, 15
        %s221 = scalar_select %p220, %s219, 15
        %s222 = smul.addr %s221, 2
        %s223 = smul.addr %s222, 8
        %s224 = scalar_lea.vmem %s2, %s223
        %s225 = smul.u32 8, %s24
        %s226 = sld [smem:[#allocation4 + %s24]]
        %p227 = scmp.lt.s32.totalorder %s226, 1
        %s228 = scalar_select %p227, %s226, 1
        %s229 = smul.addr %s228, 2
        %s230 = smul.addr %s229, 4
        %s231 = scalar_lea.vmem %s3, %s230
        %s232 = sld [smem:[#allocation4 + %s24]]
        %s233 = smul.u32 8, %s24
        %v234 = vld [vmem:[%s231] sm:$0xff]
        %235 = vst [vmem:[#allocation2] sm:$0xff] 0.0
        %236 = vst [vmem:[#allocation2 + $0x8] sm:$0xff] 0.0
        %237 = vst [vmem:[#allocation2 + $0x10] sm:$0xff] 0.0
        %238 = vst [vmem:[#allocation2 + $0x18] sm:$0xff] 0.0
        %239 = vst [vmem:[#allocation2 + $0x20] sm:$0xff] 0.0
        %240 = vst [vmem:[#allocation2 + $0x28] sm:$0xff] 0.0
        %241 = vst [vmem:[#allocation2 + $0x30] sm:$0xff] 0.0
        %242 = vst [vmem:[#allocation2 + $0x38] sm:$0xff] 0.0
        %243 = vst [vmem:[#allocation2 + $0x40] sm:$0xff] 0.0
        %244 = vst [vmem:[#allocation2 + $0x48] sm:$0xff] 0.0
        %245 = vst [vmem:[#allocation2 + $0x50] sm:$0xff] 0.0
        %246 = vst [vmem:[#allocation2 + $0x58] sm:$0xff] 0.0
        %247 = vst [vmem:[#allocation2 + $0x60] sm:$0xff] 0.0
        %248 = vst [vmem:[#allocation2 + $0x68] sm:$0xff] 0.0
        %v249 = vld [vmem:[%s217] sm:$0x7f]
        %v250 = vld [vmem:[%s217 + $0x8] sm:$0x7f]
        %v251 = vld [vmem:[%s224] sm:$0x7f]
        %v252 = vld [vmem:[%s224 + $0x8] sm:$0x7f]
        %v253 = vlaneseq
        %v254 = vshrl.u32 %v253, 7
        %v255 = vsub.s32 0, %v254
        %v256 = vrot.slane %v249, %v255
        %v257 = vlaneseq
        %v258 = vshrl.u32 %v257, 7
        %v259 = vsub.s32 0, %v258
        %v260 = vrot.slane %v250, %v259
        %v261 = vmul.f32 %v256, %v251
        %v262 = vmul.f32 %v260, %v252
        %263 = vst [vmem:[#allocation2] sm:$0x7f] %v261
        %264 = vst [vmem:[#allocation2 + $0x8] sm:$0x7f] %v262
        %v265 = vlaneseq
        %v266 = vshrl.u32 %v265, 7
        %v267 = vsub.s32 1, %v266
        %v268 = vrot.slane %v249, %v267
        %v269 = vlaneseq
        %v270 = vshrl.u32 %v269, 7
        %v271 = vsub.s32 1, %v270
        %v272 = vrot.slane %v250, %v271
        %v273 = vmul.f32 %v268, %v251
        %v274 = vmul.f32 %v272, %v252
        %275 = vst [vmem:[#allocation2 + $0x10] sm:$0x7f] %v273
        %276 = vst [vmem:[#allocation2 + $0x18] sm:$0x7f] %v274
        %v277 = vlaneseq
        %v278 = vshrl.u32 %v277, 7
        %v279 = vsub.s32 2, %v278
        %v280 = vrot.slane %v249, %v279
        %v281 = vlaneseq
        %v282 = vshrl.u32 %v281, 7
        %v283 = vsub.s32 2, %v282
        %v284 = vrot.slane %v250, %v283
        %v285 = vmul.f32 %v280, %v251
        %v286 = vmul.f32 %v284, %v252
        %287 = vst [vmem:[#allocation2 + $0x20] sm:$0x7f] %v285
        %288 = vst [vmem:[#allocation2 + $0x28] sm:$0x7f] %v286
        %v289 = vlaneseq
        %v290 = vshrl.u32 %v289, 7
        %v291 = vsub.s32 3, %v290
        %v292 = vrot.slane %v249, %v291
        %v293 = vlaneseq
        %v294 = vshrl.u32 %v293, 7
        %v295 = vsub.s32 3, %v294
        %v296 = vrot.slane %v250, %v295
        %v297 = vmul.f32 %v292, %v251
        %v298 = vmul.f32 %v296, %v252
        %299 = vst [vmem:[#allocation2 + $0x30] sm:$0x7f] %v297
        %300 = vst [vmem:[#allocation2 + $0x38] sm:$0x7f] %v298
        %v301 = vlaneseq
        %v302 = vshrl.u32 %v301, 7
        %v303 = vsub.s32 4, %v302
        %v304 = vrot.slane %v249, %v303
        %v305 = vlaneseq
        %v306 = vshrl.u32 %v305, 7
        %v307 = vsub.s32 4, %v306
        %v308 = vrot.slane %v250, %v307
        %v309 = vmul.f32 %v304, %v251
        %v310 = vmul.f32 %v308, %v252
        %311 = vst [vmem:[#allocation2 + $0x40] sm:$0x7f] %v309
        %312 = vst [vmem:[#allocation2 + $0x48] sm:$0x7f] %v310
        %v313 = vlaneseq
        %v314 = vshrl.u32 %v313, 7
        %v315 = vsub.s32 5, %v314
        %v316 = vrot.slane %v249, %v315
        %v317 = vlaneseq
        %v318 = vshrl.u32 %v317, 7
        %v319 = vsub.s32 5, %v318
        %v320 = vrot.slane %v250, %v319
        %v321 = vmul.f32 %v316, %v251
        %v322 = vmul.f32 %v320, %v252
        %323 = vst [vmem:[#allocation2 + $0x50] sm:$0x7f] %v321
        %324 = vst [vmem:[#allocation2 + $0x58] sm:$0x7f] %v322
        %v325 = vlaneseq
        %v326 = vshrl.u32 %v325, 7
        %v327 = vsub.s32 6, %v326
        %v328 = vrot.slane %v249, %v327
        %v329 = vlaneseq
        %v330 = vshrl.u32 %v329, 7
        %v331 = vsub.s32 6, %v330
        %v332 = vrot.slane %v250, %v331
        %v333 = vmul.f32 %v328, %v251
        %v334 = vmul.f32 %v332, %v252
        %335 = vst [vmem:[#allocation2 + $0x60] sm:$0x7f] %v333
        %336 = vst [vmem:[#allocation2 + $0x68] sm:$0x7f] %v334
        %v337 = vld [vmem:[#allocation2] sm:$0xff]
        %v338 = vld [vmem:[#allocation2 + $0x8] sm:$0xff]
        %v339 = vld [vmem:[#allocation2 + $0x10] sm:$0xff]
        %v340 = vld [vmem:[#allocation2 + $0x18] sm:$0xff]
        %v341 = vld [vmem:[#allocation2 + $0x20] sm:$0xff]
        %v342 = vld [vmem:[#allocation2 + $0x28] sm:$0xff]
        %v343 = vld [vmem:[#allocation2 + $0x30] sm:$0xff]
        %v344 = vld [vmem:[#allocation2 + $0x38] sm:$0xff]
        %v345 = vld [vmem:[#allocation2 + $0x40] sm:$0xff]
        %v346 = vld [vmem:[#allocation2 + $0x48] sm:$0xff]
        %v347 = vld [vmem:[#allocation2 + $0x50] sm:$0xff]
        %v348 = vld [vmem:[#allocation2 + $0x58] sm:$0xff]
        %v349 = vld [vmem:[#allocation2 + $0x60] sm:$0xff]
        %v350 = vld [vmem:[#allocation2 + $0x68] sm:$0xff]
        %v352 = vcombine.high %v234, %v234
        %354 = vmatprep.subr.mxu0 %v338
        %355 = vmatpush1.xpose.msra.mxu0 %v337
        %356 = vmatprep.subr.mxu0 %v340
        %357 = vmatpush1.xpose.msra.mxu0 %v339
        %358 = vmatprep.subr.mxu0 %v342
        %359 = vmatpush1.xpose.msra.mxu0 %v341
        %360 = vmatprep.subr.mxu0 %v344
        %361 = vmatpush1.xpose.msra.mxu0 %v343
        %362 = vmatprep.subr.mxu0 %v346
        %363 = vmatpush1.xpose.msra.mxu0 %v345
        %364 = vmatprep.subr.mxu0 %v348
        %365 = vmatpush1.xpose.msra.mxu0 %v347
        %366 = vmatprep.subr.mxu0 %v350
        %367 = vmatpush1.xpose.msra.mxu0 %v349
        %368 = vmatprep.subr.mxu0 0.0
        %369 = vmatpush1.xpose.msra.mxu0 0.0
        %370 = vmatprep.subr.mxu0 0.0
        %371 = vmatpush1.xpose.msra.mxu0 0.0
        %372 = vmatprep.subr.mxu0 0.0
        %373 = vmatpush1.xpose.msra.mxu0 0.0
        %374 = vmatprep.subr.mxu0 0.0
        %375 = vmatpush1.xpose.msra.mxu0 0.0
        %376 = vmatprep.subr.mxu0 0.0
        %377 = vmatpush1.xpose.msra.mxu0 0.0
        %378 = vmatprep.subr.mxu0 0.0
        %379 = vmatpush1.xpose.msra.mxu0 0.0
        %380 = vmatprep.subr.mxu0 0.0
        %381 = vmatpush1.xpose.msra.mxu0 0.0
        %382 = vmatprep.subr.mxu0 0.0
        %383 = vmatpush1.xpose.msra.mxu0 0.0
        %384 = vmatprep.subr.mxu0 0.0
        %385 = vmatpush1.xpose.msra.mxu0 0.0
        %386 = vmatprep.subr.mxu0 0.0
        %387 = vmatpush1.xpose.msra.mxu0 0.0
        %388 = vmatprep.subr.mxu0 0.0
        %389 = vmatpush1.xpose.msra.mxu0 0.0
        %390 = vmatprep.subr.mxu0 0.0
        %391 = vmatpush1.xpose.msra.mxu0 0.0
        %392 = vmatprep.subr.mxu0 0.0
        %393 = vmatpush1.xpose.msra.mxu0 0.0
        %394 = vmatprep.subr.mxu0 0.0
        %395 = vmatpush1.xpose.msra.mxu0 0.0
        %396 = vmatprep.subr.mxu0 0.0
        %397 = vmatpush1.xpose.msra.mxu0 0.0
        %398 = vmatprep.subr.mxu0 0.0
        %399 = vmatpush1.xpose.msra.mxu0 0.0
        %400 = vmatprep.subr.mxu0 0.0
        %401 = vmatpush1.xpose.msra.mxu0 0.0
        %402 = vmatprep.subr.mxu0 0.0
        %403 = vmatpush1.xpose.msra.mxu0 0.0
        %404 = vmatprep.subr.mxu0 0.0
        %405 = vmatpush1.xpose.msra.mxu0 0.0
        %406 = vmatprep.subr.mxu0 0.0
        %407 = vmatpush1.xpose.msra.mxu0 0.0
        %408 = vmatprep.subr.mxu0 0.0
        %409 = vmatpush1.xpose.msra.mxu0 0.0
        %410 = vmatprep.subr.mxu0 0.0
        %411 = vmatpush1.xpose.msra.mxu0 0.0
        %412 = vmatprep.subr.mxu0 0.0
        %413 = vmatpush1.xpose.msra.mxu0 0.0
        %414 = vmatprep.subr.mxu0 0.0
        %415 = vmatpush1.xpose.msra.mxu0 0.0
        %416 = vmatprep.subr.mxu0 0.0
        %417 = vmatpush1.xpose.msra.mxu0 0.0
        %418 = vmatprep.mubr.f32.mxu0 %v352
        %419 = vmatmul.mubr.f32.gmra.mrb[0].mxu0 %v234
        %v420 = vpop.f32.mrb[0].mxu0
        %v421 = vadd.f32 0.0, %v420
        %v422 = vpop.f32.mrb[0].mxu0
        %423 = vdwg.mxu0
        %vm424 = vcmask 453632
        %425 = vst.msk [vmem:[%s211] sm:$0xf] %vm424, %v421
        %s426 = scalar_lea.vmem %s217, 16
        %v427 = vld [vmem:[%s426] sm:$0x7f]
        %v428 = vld [vmem:[%s426 + $0x8] sm:$0x7f]
        %s429 = scalar_lea.vmem %s224, 16
        %v430 = vld [vmem:[%s429] sm:$0x7f]
        %v431 = vld [vmem:[%s429 + $0x8] sm:$0x7f]
        %v432 = vlaneseq
        %v433 = vshrl.u32 %v432, 7
        %v434 = vsub.s32 0, %v433
        %v435 = vrot.slane %v427, %v434
        %v436 = vlaneseq
        %v437 = vshrl.u32 %v436, 7
        %v438 = vsub.s32 0, %v437
        %v439 = vrot.slane %v428, %v438
        %v440 = vmul.f32 %v435, %v430
        %v441 = vmul.f32 %v439, %v431
        %442 = vst [vmem:[#allocation2] sm:$0x7f] %v440
        %443 = vst [vmem:[#allocation2 + $0x8] sm:$0x7f] %v441
        %v444 = vlaneseq
        %v445 = vshrl.u32 %v444, 7
        %v446 = vsub.s32 1, %v445
        %v447 = vrot.slane %v427, %v446
        %v448 = vlaneseq
        %v449 = vshrl.u32 %v448, 7
        %v450 = vsub.s32 1, %v449
        %v451 = vrot.slane %v428, %v450
        %v452 = vmul.f32 %v447, %v430
        %v453 = vmul.f32 %v451, %v431
        %454 = vst [vmem:[#allocation2 + $0x10] sm:$0x7f] %v452
        %455 = vst [vmem:[#allocation2 + $0x18] sm:$0x7f] %v453
        %v456 = vlaneseq
        %v457 = vshrl.u32 %v456, 7
        %v458 = vsub.s32 2, %v457
        %v459 = vrot.slane %v427, %v458
        %v460 = vlaneseq
        %v461 = vshrl.u32 %v460, 7
        %v462 = vsub.s32 2, %v461
        %v463 = vrot.slane %v428, %v462
        %v464 = vmul.f32 %v459, %v430
        %v465 = vmul.f32 %v463, %v431
        %466 = vst [vmem:[#allocation2 + $0x20] sm:$0x7f] %v464
        %467 = vst [vmem:[#allocation2 + $0x28] sm:$0x7f] %v465
        %v468 = vlaneseq
        %v469 = vshrl.u32 %v468, 7
        %v470 = vsub.s32 3, %v469
        %v471 = vrot.slane %v427, %v470
        %v472 = vlaneseq
        %v473 = vshrl.u32 %v472, 7
        %v474 = vsub.s32 3, %v473
        %v475 = vrot.slane %v428, %v474
        %v476 = vmul.f32 %v471, %v430
        %v477 = vmul.f32 %v475, %v431
        %478 = vst [vmem:[#allocation2 + $0x30] sm:$0x7f] %v476
        %479 = vst [vmem:[#allocation2 + $0x38] sm:$0x7f] %v477
        %v480 = vlaneseq
        %v481 = vshrl.u32 %v480, 7
        %v482 = vsub.s32 4, %v481
        %v483 = vrot.slane %v427, %v482
        %v484 = vlaneseq
        %v485 = vshrl.u32 %v484, 7
        %v486 = vsub.s32 4, %v485
        %v487 = vrot.slane %v428, %v486
        %v488 = vmul.f32 %v483, %v430
        %v489 = vmul.f32 %v487, %v431
        %490 = vst [vmem:[#allocation2 + $0x40] sm:$0x7f] %v488
        %491 = vst [vmem:[#allocation2 + $0x48] sm:$0x7f] %v489
        %v492 = vlaneseq
        %v493 = vshrl.u32 %v492, 7
        %v494 = vsub.s32 5, %v493
        %v495 = vrot.slane %v427, %v494
        %v496 = vlaneseq
        %v497 = vshrl.u32 %v496, 7
        %v498 = vsub.s32 5, %v497
        %v499 = vrot.slane %v428, %v498
        %v500 = vmul.f32 %v495, %v430
        %v501 = vmul.f32 %v499, %v431
        %502 = vst [vmem:[#allocation2 + $0x50] sm:$0x7f] %v500
        %503 = vst [vmem:[#allocation2 + $0x58] sm:$0x7f] %v501
        %v504 = vlaneseq
        %v505 = vshrl.u32 %v504, 7
        %v506 = vsub.s32 6, %v505
        %v507 = vrot.slane %v427, %v506
        %v508 = vlaneseq
        %v509 = vshrl.u32 %v508, 7
        %v510 = vsub.s32 6, %v509
        %v511 = vrot.slane %v428, %v510
        %v512 = vmul.f32 %v507, %v430
        %v513 = vmul.f32 %v511, %v431
        %514 = vst [vmem:[#allocation2 + $0x60] sm:$0x7f] %v512
        %515 = vst [vmem:[#allocation2 + $0x68] sm:$0x7f] %v513
        %v516 = vld [vmem:[#allocation2] sm:$0xff]
        %v517 = vld [vmem:[#allocation2 + $0x8] sm:$0xff]
        %v518 = vld [vmem:[#allocation2 + $0x10] sm:$0xff]
        %v519 = vld [vmem:[#allocation2 + $0x18] sm:$0xff]
        %v520 = vld [vmem:[#allocation2 + $0x20] sm:$0xff]
        %v521 = vld [vmem:[#allocation2 + $0x28] sm:$0xff]
        %v522 = vld [vmem:[#allocation2 + $0x30] sm:$0xff]
        %v523 = vld [vmem:[#allocation2 + $0x38] sm:$0xff]
        %v524 = vld [vmem:[#allocation2 + $0x40] sm:$0xff]
        %v525 = vld [vmem:[#allocation2 + $0x48] sm:$0xff]
        %v526 = vld [vmem:[#allocation2 + $0x50] sm:$0xff]
        %v527 = vld [vmem:[#allocation2 + $0x58] sm:$0xff]
        %v528 = vld [vmem:[#allocation2 + $0x60] sm:$0xff]
        %v529 = vld [vmem:[#allocation2 + $0x68] sm:$0xff]
        %530 = vmatprep.subr.mxu0 %v517
        %531 = vmatpush1.xpose.msra.mxu0 %v516
        %532 = vmatprep.subr.mxu0 %v519
        %533 = vmatpush1.xpose.msra.mxu0 %v518
        %534 = vmatprep.subr.mxu0 %v521
        %535 = vmatpush1.xpose.msra.mxu0 %v520
        %536 = vmatprep.subr.mxu0 %v523
        %537 = vmatpush1.xpose.msra.mxu0 %v522
        %538 = vmatprep.subr.mxu0 %v525
        %539 = vmatpush1.xpose.msra.mxu0 %v524
        %540 = vmatprep.subr.mxu0 %v527
        %541 = vmatpush1.xpose.msra.mxu0 %v526
        %542 = vmatprep.subr.mxu0 %v529
        %543 = vmatpush1.xpose.msra.mxu0 %v528
        %544 = vmatprep.subr.mxu0 0.0
        %545 = vmatpush1.xpose.msra.mxu0 0.0
        %546 = vmatprep.subr.mxu0 0.0
        %547 = vmatpush1.xpose.msra.mxu0 0.0
        %548 = vmatprep.subr.mxu0 0.0
        %549 = vmatpush1.xpose.msra.mxu0 0.0
        %550 = vmatprep.subr.mxu0 0.0
        %551 = vmatpush1.xpose.msra.mxu0 0.0
        %552 = vmatprep.subr.mxu0 0.0
        %553 = vmatpush1.xpose.msra.mxu0 0.0
        %554 = vmatprep.subr.mxu0 0.0
        %555 = vmatpush1.xpose.msra.mxu0 0.0
        %556 = vmatprep.subr.mxu0 0.0
        %557 = vmatpush1.xpose.msra.mxu0 0.0
        %558 = vmatprep.subr.mxu0 0.0
        %559 = vmatpush1.xpose.msra.mxu0 0.0
        %560 = vmatprep.subr.mxu0 0.0
        %561 = vmatpush1.xpose.msra.mxu0 0.0
        %562 = vmatprep.subr.mxu0 0.0
        %563 = vmatpush1.xpose.msra.mxu0 0.0
        %564 = vmatprep.subr.mxu0 0.0
        %565 = vmatpush1.xpose.msra.mxu0 0.0
        %566 = vmatprep.subr.mxu0 0.0
        %567 = vmatpush1.xpose.msra.mxu0 0.0
        %568 = vmatprep.subr.mxu0 0.0
        %569 = vmatpush1.xpose.msra.mxu0 0.0
        %570 = vmatprep.subr.mxu0 0.0
        %571 = vmatpush1.xpose.msra.mxu0 0.0
        %572 = vmatprep.subr.mxu0 0.0
        %573 = vmatpush1.xpose.msra.mxu0 0.0
        %574 = vmatprep.subr.mxu0 0.0
        %575 = vmatpush1.xpose.msra.mxu0 0.0
        %576 = vmatprep.subr.mxu0 0.0
        %577 = vmatpush1.xpose.msra.mxu0 0.0
        %578 = vmatprep.subr.mxu0 0.0
        %579 = vmatpush1.xpose.msra.mxu0 0.0
        %580 = vmatprep.subr.mxu0 0.0
        %581 = vmatpush1.xpose.msra.mxu0 0.0
        %582 = vmatprep.subr.mxu0 0.0
        %583 = vmatpush1.xpose.msra.mxu0 0.0
        %584 = vmatprep.subr.mxu0 0.0
        %585 = vmatpush1.xpose.msra.mxu0 0.0
        %586 = vmatprep.subr.mxu0 0.0
        %587 = vmatpush1.xpose.msra.mxu0 0.0
        %588 = vmatprep.subr.mxu0 0.0
        %589 = vmatpush1.xpose.msra.mxu0 0.0
        %590 = vmatprep.subr.mxu0 0.0
        %591 = vmatpush1.xpose.msra.mxu0 0.0
        %592 = vmatprep.subr.mxu0 0.0
        %593 = vmatpush1.xpose.msra.mxu0 0.0
        %594 = vmatprep.mubr.f32.mxu0 %v352
        %595 = vmatmul.mubr.f32.gmra.mrb[0].mxu0 %v234
        %v596 = vpop.f32.mrb[0].mxu0
        %v597 = vadd.f32 0.0, %v596
        %v598 = vpop.f32.mrb[0].mxu0
        %599 = vdwg.mxu0
        %s600 = scalar_lea.vmem %s211, 4 [#allocation5]
        %601 = vst.msk [vmem:[%s600] sm:$0xf] %vm424, %v597
        %s602 = scalar_lea.vmem %s217, 32
        %v603 = vld [vmem:[%s602] sm:$0x7f]
        %v604 = vld [vmem:[%s602 + $0x8] sm:$0x7f]
        %s605 = scalar_lea.vmem %s224, 32
        %v606 = vld [vmem:[%s605] sm:$0x7f]
        %v607 = vld [vmem:[%s605 + $0x8] sm:$0x7f]
        %v608 = vlaneseq
        %v609 = vshrl.u32 %v608, 7
        %v610 = vsub.s32 0, %v609
        %v611 = vrot.slane %v603, %v610
        %v612 = vlaneseq
        %v613 = vshrl.u32 %v612, 7
        %v614 = vsub.s32 0, %v613
        %v615 = vrot.slane %v604, %v614
        %v616 = vmul.f32 %v611, %v606
        %v617 = vmul.f32 %v615, %v607
        %618 = vst [vmem:[#allocation2] sm:$0x7f] %v616
        %619 = vst [vmem:[#allocation2 + $0x8] sm:$0x7f] %v617
        %v620 = vlaneseq
        %v621 = vshrl.u32 %v620, 7
        %v622 = vsub.s32 1, %v621
        %v623 = vrot.slane %v603, %v622
        %v624 = vlaneseq
        %v625 = vshrl.u32 %v624, 7
        %v626 = vsub.s32 1, %v625
        %v627 = vrot.slane %v604, %v626
        %v628 = vmul.f32 %v623, %v606
        %v629 = vmul.f32 %v627, %v607
        %630 = vst [vmem:[#allocation2 + $0x10] sm:$0x7f] %v628
        %631 = vst [vmem:[#allocation2 + $0x18] sm:$0x7f] %v629
        %v632 = vlaneseq
        %v633 = vshrl.u32 %v632, 7
        %v634 = vsub.s32 2, %v633
        %v635 = vrot.slane %v603, %v634
        %v636 = vlaneseq
        %v637 = vshrl.u32 %v636, 7
        %v638 = vsub.s32 2, %v637
        %v639 = vrot.slane %v604, %v638
        %v640 = vmul.f32 %v635, %v606
        %v641 = vmul.f32 %v639, %v607
        %642 = vst [vmem:[#allocation2 + $0x20] sm:$0x7f] %v640
        %643 = vst [vmem:[#allocation2 + $0x28] sm:$0x7f] %v641
        %v644 = vlaneseq
        %v645 = vshrl.u32 %v644, 7
        %v646 = vsub.s32 3, %v645
        %v647 = vrot.slane %v603, %v646
        %v648 = vlaneseq
        %v649 = vshrl.u32 %v648, 7
        %v650 = vsub.s32 3, %v649
        %v651 = vrot.slane %v604, %v650
        %v652 = vmul.f32 %v647, %v606
        %v653 = vmul.f32 %v651, %v607
        %654 = vst [vmem:[#allocation2 + $0x30] sm:$0x7f] %v652
        %655 = vst [vmem:[#allocation2 + $0x38] sm:$0x7f] %v653
        %v656 = vlaneseq
        %v657 = vshrl.u32 %v656, 7
        %v658 = vsub.s32 4, %v657
        %v659 = vrot.slane %v603, %v658
        %v660 = vlaneseq
        %v661 = vshrl.u32 %v660, 7
        %v662 = vsub.s32 4, %v661
        %v663 = vrot.slane %v604, %v662
        %v664 = vmul.f32 %v659, %v606
        %v665 = vmul.f32 %v663, %v607
        %666 = vst [vmem:[#allocation2 + $0x40] sm:$0x7f] %v664
        %667 = vst [vmem:[#allocation2 + $0x48] sm:$0x7f] %v665
        %v668 = vlaneseq
        %v669 = vshrl.u32 %v668, 7
        %v670 = vsub.s32 5, %v669
        %v671 = vrot.slane %v603, %v670
        %v672 = vlaneseq
        %v673 = vshrl.u32 %v672, 7
        %v674 = vsub.s32 5, %v673
        %v675 = vrot.slane %v604, %v674
        %v676 = vmul.f32 %v671, %v606
        %v677 = vmul.f32 %v675, %v607
        %678 = vst [vmem:[#allocation2 + $0x50] sm:$0x7f] %v676
        %679 = vst [vmem:[#allocation2 + $0x58] sm:$0x7f] %v677
        %v680 = vlaneseq
        %v681 = vshrl.u32 %v680, 7
        %v682 = vsub.s32 6, %v681
        %v683 = vrot.slane %v603, %v682
        %v684 = vlaneseq
        %v685 = vshrl.u32 %v684, 7
        %v686 = vsub.s32 6, %v685
        %v687 = vrot.slane %v604, %v686
        %v688 = vmul.f32 %v683, %v606
        %v689 = vmul.f32 %v687, %v607
        %690 = vst [vmem:[#allocation2 + $0x60] sm:$0x7f] %v688
        %691 = vst [vmem:[#allocation2 + $0x68] sm:$0x7f] %v689
        %v692 = vld [vmem:[#allocation2] sm:$0xff]
        %v693 = vld [vmem:[#allocation2 + $0x8] sm:$0xff]
        %v694 = vld [vmem:[#allocation2 + $0x10] sm:$0xff]
        %v695 = vld [vmem:[#allocation2 + $0x18] sm:$0xff]
        %v696 = vld [vmem:[#allocation2 + $0x20] sm:$0xff]
        %v697 = vld [vmem:[#allocation2 + $0x28] sm:$0xff]
        %v698 = vld [vmem:[#allocation2 + $0x30] sm:$0xff]
        %v699 = vld [vmem:[#allocation2 + $0x38] sm:$0xff]
        %v700 = vld [vmem:[#allocation2 + $0x40] sm:$0xff]
        %v701 = vld [vmem:[#allocation2 + $0x48] sm:$0xff]
        %v702 = vld [vmem:[#allocation2 + $0x50] sm:$0xff]
        %v703 = vld [vmem:[#allocation2 + $0x58] sm:$0xff]
        %v704 = vld [vmem:[#allocation2 + $0x60] sm:$0xff]
        %v705 = vld [vmem:[#allocation2 + $0x68] sm:$0xff]
        %706 = vmatprep.subr.mxu0 %v693
        %707 = vmatpush1.xpose.msra.mxu0 %v692
        %708 = vmatprep.subr.mxu0 %v695
        %709 = vmatpush1.xpose.msra.mxu0 %v694
        %710 = vmatprep.subr.mxu0 %v697
        %711 = vmatpush1.xpose.msra.mxu0 %v696
        %712 = vmatprep.subr.mxu0 %v699
        %713 = vmatpush1.xpose.msra.mxu0 %v698
        %714 = vmatprep.subr.mxu0 %v701
        %715 = vmatpush1.xpose.msra.mxu0 %v700
        %716 = vmatprep.subr.mxu0 %v703
        %717 = vmatpush1.xpose.msra.mxu0 %v702
        %718 = vmatprep.subr.mxu0 %v705
        %719 = vmatpush1.xpose.msra.mxu0 %v704
        %720 = vmatprep.subr.mxu0 0.0
        %721 = vmatpush1.xpose.msra.mxu0 0.0
        %722 = vmatprep.subr.mxu0 0.0
        %723 = vmatpush1.xpose.msra.mxu0 0.0
        %724 = vmatprep.subr.mxu0 0.0
        %725 = vmatpush1.xpose.msra.mxu0 0.0
        %726 = vmatprep.subr.mxu0 0.0
        %727 = vmatpush1.xpose.msra.mxu0 0.0
        %728 = vmatprep.subr.mxu0 0.0
        %729 = vmatpush1.xpose.msra.mxu0 0.0
        %730 = vmatprep.subr.mxu0 0.0
        %731 = vmatpush1.xpose.msra.mxu0 0.0
        %732 = vmatprep.subr.mxu0 0.0
        %733 = vmatpush1.xpose.msra.mxu0 0.0
        %734 = vmatprep.subr.mxu0 0.0
        %735 = vmatpush1.xpose.msra.mxu0 0.0
        %736 = vmatprep.subr.mxu0 0.0
        %737 = vmatpush1.xpose.msra.mxu0 0.0
        %738 = vmatprep.subr.mxu0 0.0
        %739 = vmatpush1.xpose.msra.mxu0 0.0
        %740 = vmatprep.subr.mxu0 0.0
        %741 = vmatpush1.xpose.msra.mxu0 0.0
        %742 = vmatprep.subr.mxu0 0.0
        %743 = vmatpush1.xpose.msra.mxu0 0.0
        %744 = vmatprep.subr.mxu0 0.0
        %745 = vmatpush1.xpose.msra.mxu0 0.0
        %746 = vmatprep.subr.mxu0 0.0
        %747 = vmatpush1.xpose.msra.mxu0 0.0
        %748 = vmatprep.subr.mxu0 0.0
        %749 = vmatpush1.xpose.msra.mxu0 0.0
        %750 = vmatprep.subr.mxu0 0.0
        %751 = vmatpush1.xpose.msra.mxu0 0.0
        %752 = vmatprep.subr.mxu0 0.0
        %753 = vmatpush1.xpose.msra.mxu0 0.0
        %754 = vmatprep.subr.mxu0 0.0
        %755 = vmatpush1.xpose.msra.mxu0 0.0
        %756 = vmatprep.subr.mxu0 0.0
        %757 = vmatpush1.xpose.msra.mxu0 0.0
        %758 = vmatprep.subr.mxu0 0.0
        %759 = vmatpush1.xpose.msra.mxu0 0.0
        %760 = vmatprep.subr.mxu0 0.0
        %761 = vmatpush1.xpose.msra.mxu0 0.0
        %762 = vmatprep.subr.mxu0 0.0
        %763 = vmatpush1.xpose.msra.mxu0 0.0
        %764 = vmatprep.subr.mxu0 0.0
        %765 = vmatpush1.xpose.msra.mxu0 0.0
        %766 = vmatprep.subr.mxu0 0.0
        %767 = vmatpush1.xpose.msra.mxu0 0.0
        %768 = vmatprep.subr.mxu0 0.0
        %769 = vmatpush1.xpose.msra.mxu0 0.0
        %770 = vmatprep.mubr.f32.mxu0 %v352
        %771 = vmatmul.mubr.f32.gmra.mrb[0].mxu0 %v234
        %v772 = vpop.f32.mrb[0].mxu0
        %v773 = vadd.f32 0.0, %v772
        %v774 = vpop.f32.mrb[0].mxu0
        %775 = vdwg.mxu0
        %s776 = scalar_lea.vmem %s211, 8 [#allocation5]
        %777 = vst.msk [vmem:[%s776] sm:$0xf] %vm424, %v773
        %s778 = scalar_lea.vmem %s217, 48
        %v779 = vld [vmem:[%s778] sm:$0x7f]
        %v780 = vld [vmem:[%s778 + $0x8] sm:$0x7f]
        %s781 = scalar_lea.vmem %s224, 48
        %v782 = vld [vmem:[%s781] sm:$0x7f]
        %v783 = vld [vmem:[%s781 + $0x8] sm:$0x7f]
        %v784 = vlaneseq
        %v785 = vshrl.u32 %v784, 7
        %v786 = vsub.s32 0, %v785
        %v787 = vrot.slane %v779, %v786
        %v788 = vlaneseq
        %v789 = vshrl.u32 %v788, 7
        %v790 = vsub.s32 0, %v789
        %v791 = vrot.slane %v780, %v790
        %v792 = vmul.f32 %v787, %v782
        %v793 = vmul.f32 %v791, %v783
        %794 = vst [vmem:[#allocation2] sm:$0x7f] %v792
        %795 = vst [vmem:[#allocation2 + $0x8] sm:$0x7f] %v793
        %v796 = vlaneseq
        %v797 = vshrl.u32 %v796, 7
        %v798 = vsub.s32 1, %v797
        %v799 = vrot.slane %v779, %v798
        %v800 = vlaneseq
        %v801 = vshrl.u32 %v800, 7
        %v802 = vsub.s32 1, %v801
        %v803 = vrot.slane %v780, %v802
        %v804 = vmul.f32 %v799, %v782
        %v805 = vmul.f32 %v803, %v783
        %806 = vst [vmem:[#allocation2 + $0x10] sm:$0x7f] %v804
        %807 = vst [vmem:[#allocation2 + $0x18] sm:$0x7f] %v805
        %v808 = vlaneseq
        %v809 = vshrl.u32 %v808, 7
        %v810 = vsub.s32 2, %v809
        %v811 = vrot.slane %v779, %v810
        %v812 = vlaneseq
        %v813 = vshrl.u32 %v812, 7
        %v814 = vsub.s32 2, %v813
        %v815 = vrot.slane %v780, %v814
        %v816 = vmul.f32 %v811, %v782
        %v817 = vmul.f32 %v815, %v783
        %818 = vst [vmem:[#allocation2 + $0x20] sm:$0x7f] %v816
        %819 = vst [vmem:[#allocation2 + $0x28] sm:$0x7f] %v817
        %v820 = vlaneseq
        %v821 = vshrl.u32 %v820, 7
        %v822 = vsub.s32 3, %v821
        %v823 = vrot.slane %v779, %v822
        %v824 = vlaneseq
        %v825 = vshrl.u32 %v824, 7
        %v826 = vsub.s32 3, %v825
        %v827 = vrot.slane %v780, %v826
        %v828 = vmul.f32 %v823, %v782
        %v829 = vmul.f32 %v827, %v783
        %830 = vst [vmem:[#allocation2 + $0x30] sm:$0x7f] %v828
        %831 = vst [vmem:[#allocation2 + $0x38] sm:$0x7f] %v829
        %v832 = vlaneseq
        %v833 = vshrl.u32 %v832, 7
        %v834 = vsub.s32 4, %v833
        %v835 = vrot.slane %v779, %v834
        %v836 = vlaneseq
        %v837 = vshrl.u32 %v836, 7
        %v838 = vsub.s32 4, %v837
        %v839 = vrot.slane %v780, %v838
        %v840 = vmul.f32 %v835, %v782
        %v841 = vmul.f32 %v839, %v783
        %842 = vst [vmem:[#allocation2 + $0x40] sm:$0x7f] %v840
        %843 = vst [vmem:[#allocation2 + $0x48] sm:$0x7f] %v841
        %v844 = vlaneseq
        %v845 = vshrl.u32 %v844, 7
        %v846 = vsub.s32 5, %v845
        %v847 = vrot.slane %v779, %v846
        %v848 = vlaneseq
        %v849 = vshrl.u32 %v848, 7
        %v850 = vsub.s32 5, %v849
        %v851 = vrot.slane %v780, %v850
        %v852 = vmul.f32 %v847, %v782
        %v853 = vmul.f32 %v851, %v783
        %854 = vst [vmem:[#allocation2 + $0x50] sm:$0x7f] %v852
        %855 = vst [vmem:[#allocation2 + $0x58] sm:$0x7f] %v853
        %v856 = vlaneseq
        %v857 = vshrl.u32 %v856, 7
        %v858 = vsub.s32 6, %v857
        %v859 = vrot.slane %v779, %v858
        %v860 = vlaneseq
        %v861 = vshrl.u32 %v860, 7
        %v862 = vsub.s32 6, %v861
        %v863 = vrot.slane %v780, %v862
        %v864 = vmul.f32 %v859, %v782
        %v865 = vmul.f32 %v863, %v783
        %866 = vst [vmem:[#allocation2 + $0x60] sm:$0x7f] %v864
        %867 = vst [vmem:[#allocation2 + $0x68] sm:$0x7f] %v865
        %v868 = vld [vmem:[#allocation2] sm:$0xff]
        %v869 = vld [vmem:[#allocation2 + $0x8] sm:$0xff]
        %v870 = vld [vmem:[#allocation2 + $0x10] sm:$0xff]
        %v871 = vld [vmem:[#allocation2 + $0x18] sm:$0xff]
        %v872 = vld [vmem:[#allocation2 + $0x20] sm:$0xff]
        %v873 = vld [vmem:[#allocation2 + $0x28] sm:$0xff]
        %v874 = vld [vmem:[#allocation2 + $0x30] sm:$0xff]
        %v875 = vld [vmem:[#allocation2 + $0x38] sm:$0xff]
        %v876 = vld [vmem:[#allocation2 + $0x40] sm:$0xff]
        %v877 = vld [vmem:[#allocation2 + $0x48] sm:$0xff]
        %v878 = vld [vmem:[#allocation2 + $0x50] sm:$0xff]
        %v879 = vld [vmem:[#allocation2 + $0x58] sm:$0xff]
        %v880 = vld [vmem:[#allocation2 + $0x60] sm:$0xff]
        %v881 = vld [vmem:[#allocation2 + $0x68] sm:$0xff]
        %882 = vmatprep.subr.mxu0 %v869
        %883 = vmatpush1.xpose.msra.mxu0 %v868
        %884 = vmatprep.subr.mxu0 %v871
        %885 = vmatpush1.xpose.msra.mxu0 %v870
        %886 = vmatprep.subr.mxu0 %v873
        %887 = vmatpush1.xpose.msra.mxu0 %v872
        %888 = vmatprep.subr.mxu0 %v875
        %889 = vmatpush1.xpose.msra.mxu0 %v874
        %890 = vmatprep.subr.mxu0 %v877
        %891 = vmatpush1.xpose.msra.mxu0 %v876
        %892 = vmatprep.subr.mxu0 %v879
        %893 = vmatpush1.xpose.msra.mxu0 %v878
        %894 = vmatprep.subr.mxu0 %v881
        %895 = vmatpush1.xpose.msra.mxu0 %v880
        %896 = vmatprep.subr.mxu0 0.0
        %897 = vmatpush1.xpose.msra.mxu0 0.0
        %898 = vmatprep.subr.mxu0 0.0
        %899 = vmatpush1.xpose.msra.mxu0 0.0
        %900 = vmatprep.subr.mxu0 0.0
        %901 = vmatpush1.xpose.msra.mxu0 0.0
        %902 = vmatprep.subr.mxu0 0.0
        %903 = vmatpush1.xpose.msra.mxu0 0.0
        %904 = vmatprep.subr.mxu0 0.0
        %905 = vmatpush1.xpose.msra.mxu0 0.0
        %906 = vmatprep.subr.mxu0 0.0
        %907 = vmatpush1.xpose.msra.mxu0 0.0
        %908 = vmatprep.subr.mxu0 0.0
        %909 = vmatpush1.xpose.msra.mxu0 0.0
        %910 = vmatprep.subr.mxu0 0.0
        %911 = vmatpush1.xpose.msra.mxu0 0.0
        %912 = vmatprep.subr.mxu0 0.0
        %913 = vmatpush1.xpose.msra.mxu0 0.0
        %914 = vmatprep.subr.mxu0 0.0
        %915 = vmatpush1.xpose.msra.mxu0 0.0
        %916 = vmatprep.subr.mxu0 0.0
        %917 = vmatpush1.xpose.msra.mxu0 0.0
        %918 = vmatprep.subr.mxu0 0.0
        %919 = vmatpush1.xpose.msra.mxu0 0.0
        %920 = vmatprep.subr.mxu0 0.0
        %921 = vmatpush1.xpose.msra.mxu0 0.0
        %922 = vmatprep.subr.mxu0 0.0
        %923 = vmatpush1.xpose.msra.mxu0 0.0
        %924 = vmatprep.subr.mxu0 0.0
        %925 = vmatpush1.xpose.msra.mxu0 0.0
        %926 = vmatprep.subr.mxu0 0.0
        %927 = vmatpush1.xpose.msra.mxu0 0.0
        %928 = vmatprep.subr.mxu0 0.0
        %929 = vmatpush1.xpose.msra.mxu0 0.0
        %930 = vmatprep.subr.mxu0 0.0
        %931 = vmatpush1.xpose.msra.mxu0 0.0
        %932 = vmatprep.subr.mxu0 0.0
        %933 = vmatpush1.xpose.msra.mxu0 0.0
        %934 = vmatprep.subr.mxu0 0.0
        %935 = vmatpush1.xpose.msra.mxu0 0.0
        %936 = vmatprep.subr.mxu0 0.0
        %937 = vmatpush1.xpose.msra.mxu0 0.0
        %938 = vmatprep.subr.mxu0 0.0
        %939 = vmatpush1.xpose.msra.mxu0 0.0
        %940 = vmatprep.subr.mxu0 0.0
        %941 = vmatpush1.xpose.msra.mxu0 0.0
        %942 = vmatprep.subr.mxu0 0.0
        %943 = vmatpush1.xpose.msra.mxu0 0.0
        %944 = vmatprep.subr.mxu0 0.0
        %945 = vmatpush1.xpose.msra.mxu0 0.0
        %946 = vmatprep.mubr.f32.mxu0 %v352
        %947 = vmatmul.mubr.f32.gmra.mrb[0].mxu0 %v234
        %v948 = vpop.f32.mrb[0].mxu0
        %v949 = vadd.f32 0.0, %v948
        %v950 = vpop.f32.mrb[0].mxu0
        %951 = vdwg.mxu0
        %s952 = scalar_lea.vmem %s211, 12 [#allocation5]
        %953 = vst.msk [vmem:[%s952] sm:$0xf] %vm424, %v949
        %s954 = scalar_lea.vmem %s217, 64
        %v955 = vld [vmem:[%s954] sm:$0x7f]
        %v956 = vld [vmem:[%s954 + $0x8] sm:$0x7f]
        %s957 = scalar_lea.vmem %s224, 64
        %v958 = vld [vmem:[%s957] sm:$0x7f]
        %v959 = vld [vmem:[%s957 + $0x8] sm:$0x7f]
        %v960 = vlaneseq
        %v961 = vshrl.u32 %v960, 7
        %v962 = vsub.s32 0, %v961
        %v963 = vrot.slane %v955, %v962
        %v964 = vlaneseq
        %v965 = vshrl.u32 %v964, 7
        %v966 = vsub.s32 0, %v965
        %v967 = vrot.slane %v956, %v966
        %v968 = vmul.f32 %v963, %v958
        %v969 = vmul.f32 %v967, %v959
        %970 = vst [vmem:[#allocation2] sm:$0x7f] %v968
        %971 = vst [vmem:[#allocation2 + $0x8] sm:$0x7f] %v969
        %v972 = vlaneseq
        %v973 = vshrl.u32 %v972, 7
        %v974 = vsub.s32 1, %v973
        %v975 = vrot.slane %v955, %v974
        %v976 = vlaneseq
        %v977 = vshrl.u32 %v976, 7
        %v978 = vsub.s32 1, %v977
        %v979 = vrot.slane %v956, %v978
        %v980 = vmul.f32 %v975, %v958
        %v981 = vmul.f32 %v979, %v959
        %982 = vst [vmem:[#allocation2 + $0x10] sm:$0x7f] %v980
        %983 = vst [vmem:[#allocation2 + $0x18] sm:$0x7f] %v981
        %v984 = vlaneseq
        %v985 = vshrl.u32 %v984, 7
        %v986 = vsub.s32 2, %v985
        %v987 = vrot.slane %v955, %v986
        %v988 = vlaneseq
        %v989 = vshrl.u32 %v988, 7
        %v990 = vsub.s32 2, %v989
        %v991 = vrot.slane %v956, %v990
        %v992 = vmul.f32 %v987, %v958
        %v993 = vmul.f32 %v991, %v959
        %994 = vst [vmem:[#allocation2 + $0x20] sm:$0x7f] %v992
        %995 = vst [vmem:[#allocation2 + $0x28] sm:$0x7f] %v993
        %v996 = vlaneseq
        %v997 = vshrl.u32 %v996, 7
        %v998 = vsub.s32 3, %v997
        %v999 = vrot.slane %v955, %v998
        %v1000 = vlaneseq
        %v1001 = vshrl.u32 %v1000, 7
        %v1002 = vsub.s32 3, %v1001
        %v1003 = vrot.slane %v956, %v1002
        %v1004 = vmul.f32 %v999, %v958
        %v1005 = vmul.f32 %v1003, %v959
        %1006 = vst [vmem:[#allocation2 + $0x30] sm:$0x7f] %v1004
        %1007 = vst [vmem:[#allocation2 + $0x38] sm:$0x7f] %v1005
        %v1008 = vlaneseq
        %v1009 = vshrl.u32 %v1008, 7
        %v1010 = vsub.s32 4, %v1009
        %v1011 = vrot.slane %v955, %v1010
        %v1012 = vlaneseq
        %v1013 = vshrl.u32 %v1012, 7
        %v1014 = vsub.s32 4, %v1013
        %v1015 = vrot.slane %v956, %v1014
        %v1016 = vmul.f32 %v1011, %v958
        %v1017 = vmul.f32 %v1015, %v959
        %1018 = vst [vmem:[#allocation2 + $0x40] sm:$0x7f] %v1016
        %1019 = vst [vmem:[#allocation2 + $0x48] sm:$0x7f] %v1017
        %v1020 = vlaneseq
        %v1021 = vshrl.u32 %v1020, 7
        %v1022 = vsub.s32 5, %v1021
        %v1023 = vrot.slane %v955, %v1022
        %v1024 = vlaneseq
        %v1025 = vshrl.u32 %v1024, 7
        %v1026 = vsub.s32 5, %v1025
        %v1027 = vrot.slane %v956, %v1026
        %v1028 = vmul.f32 %v1023, %v958
        %v1029 = vmul.f32 %v1027, %v959
        %1030 = vst [vmem:[#allocation2 + $0x50] sm:$0x7f] %v1028
        %1031 = vst [vmem:[#allocation2 + $0x58] sm:$0x7f] %v1029
        %v1032 = vlaneseq
        %v1033 = vshrl.u32 %v1032, 7
        %v1034 = vsub.s32 6, %v1033
        %v1035 = vrot.slane %v955, %v1034
        %v1036 = vlaneseq
        %v1037 = vshrl.u32 %v1036, 7
        %v1038 = vsub.s32 6, %v1037
        %v1039 = vrot.slane %v956, %v1038
        %v1040 = vmul.f32 %v1035, %v958
        %v1041 = vmul.f32 %v1039, %v959
        %1042 = vst [vmem:[#allocation2 + $0x60] sm:$0x7f] %v1040
        %1043 = vst [vmem:[#allocation2 + $0x68] sm:$0x7f] %v1041
        %v1044 = vld [vmem:[#allocation2] sm:$0xff]
        %v1045 = vld [vmem:[#allocation2 + $0x8] sm:$0xff]
        %v1046 = vld [vmem:[#allocation2 + $0x10] sm:$0xff]
        %v1047 = vld [vmem:[#allocation2 + $0x18] sm:$0xff]
        %v1048 = vld [vmem:[#allocation2 + $0x20] sm:$0xff]
        %v1049 = vld [vmem:[#allocation2 + $0x28] sm:$0xff]
        %v1050 = vld [vmem:[#allocation2 + $0x30] sm:$0xff]
        %v1051 = vld [vmem:[#allocation2 + $0x38] sm:$0xff]
        %v1052 = vld [vmem:[#allocation2 + $0x40] sm:$0xff]
        %v1053 = vld [vmem:[#allocation2 + $0x48] sm:$0xff]
        %v1054 = vld [vmem:[#allocation2 + $0x50] sm:$0xff]
        %v1055 = vld [vmem:[#allocation2 + $0x58] sm:$0xff]
        %v1056 = vld [vmem:[#allocation2 + $0x60] sm:$0xff]
        %v1057 = vld [vmem:[#allocation2 + $0x68] sm:$0xff]
        %1058 = vmatprep.subr.mxu0 %v1045
        %1059 = vmatpush1.xpose.msra.mxu0 %v1044
        %1060 = vmatprep.subr.mxu0 %v1047
        %1061 = vmatpush1.xpose.msra.mxu0 %v1046
        %1062 = vmatprep.subr.mxu0 %v1049
        %1063 = vmatpush1.xpose.msra.mxu0 %v1048
        %1064 = vmatprep.subr.mxu0 %v1051
        %1065 = vmatpush1.xpose.msra.mxu0 %v1050
        %1066 = vmatprep.subr.mxu0 %v1053
        %1067 = vmatpush1.xpose.msra.mxu0 %v1052
        %1068 = vmatprep.subr.mxu0 %v1055
        %1069 = vmatpush1.xpose.msra.mxu0 %v1054
        %1070 = vmatprep.subr.mxu0 %v1057
        %1071 = vmatpush1.xpose.msra.mxu0 %v1056
        %1072 = vmatprep.subr.mxu0 0.0
        %1073 = vmatpush1.xpose.msra.mxu0 0.0
        %1074 = vmatprep.subr.mxu0 0.0
        %1075 = vmatpush1.xpose.msra.mxu0 0.0
        %1076 = vmatprep.subr.mxu0 0.0
        %1077 = vmatpush1.xpose.msra.mxu0 0.0
        %1078 = vmatprep.subr.mxu0 0.0
        %1079 = vmatpush1.xpose.msra.mxu0 0.0
        %1080 = vmatprep.subr.mxu0 0.0
        %1081 = vmatpush1.xpose.msra.mxu0 0.0
        %1082 = vmatprep.subr.mxu0 0.0
        %1083 = vmatpush1.xpose.msra.mxu0 0.0
        %1084 = vmatprep.subr.mxu0 0.0
        %1085 = vmatpush1.xpose.msra.mxu0 0.0
        %1086 = vmatprep.subr.mxu0 0.0
        %1087 = vmatpush1.xpose.msra.mxu0 0.0
        %1088 = vmatprep.subr.mxu0 0.0
        %1089 = vmatpush1.xpose.msra.mxu0 0.0
        %1090 = vmatprep.subr.mxu0 0.0
        %1091 = vmatpush1.xpose.msra.mxu0 0.0
        %1092 = vmatprep.subr.mxu0 0.0
        %1093 = vmatpush1.xpose.msra.mxu0 0.0
        %1094 = vmatprep.subr.mxu0 0.0
        %1095 = vmatpush1.xpose.msra.mxu0 0.0
        %1096 = vmatprep.subr.mxu0 0.0
        %1097 = vmatpush1.xpose.msra.mxu0 0.0
        %1098 = vmatprep.subr.mxu0 0.0
        %1099 = vmatpush1.xpose.msra.mxu0 0.0
        %1100 = vmatprep.subr.mxu0 0.0
        %1101 = vmatpush1.xpose.msra.mxu0 0.0
        %1102 = vmatprep.subr.mxu0 0.0
        %1103 = vmatpush1.xpose.msra.mxu0 0.0
        %1104 = vmatprep.subr.mxu0 0.0
        %1105 = vmatpush1.xpose.msra.mxu0 0.0
        %1106 = vmatprep.subr.mxu0 0.0
        %1107 = vmatpush1.xpose.msra.mxu0 0.0
        %1108 = vmatprep.subr.mxu0 0.0
        %1109 = vmatpush1.xpose.msra.mxu0 0.0
        %1110 = vmatprep.subr.mxu0 0.0
        %1111 = vmatpush1.xpose.msra.mxu0 0.0
        %1112 = vmatprep.subr.mxu0 0.0
        %1113 = vmatpush1.xpose.msra.mxu0 0.0
        %1114 = vmatprep.subr.mxu0 0.0
        %1115 = vmatpush1.xpose.msra.mxu0 0.0
        %1116 = vmatprep.subr.mxu0 0.0
        %1117 = vmatpush1.xpose.msra.mxu0 0.0
        %1118 = vmatprep.subr.mxu0 0.0
        %1119 = vmatpush1.xpose.msra.mxu0 0.0
        %1120 = vmatprep.subr.mxu0 0.0
        %1121 = vmatpush1.xpose.msra.mxu0 0.0
        %1122 = vmatprep.mubr.f32.mxu0 %v352
        %1123 = vmatmul.mubr.f32.gmra.mrb[0].mxu0 %v234
        %v1124 = vpop.f32.mrb[0].mxu0
        %v1125 = vadd.f32 0.0, %v1124
        %v1126 = vpop.f32.mrb[0].mxu0
        %1127 = vdwg.mxu0
        %s1128 = scalar_lea.vmem %s211, 16 [#allocation5]
        %1129 = vst.msk [vmem:[%s1128] sm:$0xf] %vm424, %v1125
        %s1130 = scalar_lea.vmem %s217, 80
        %v1131 = vld [vmem:[%s1130] sm:$0x7f]
        %v1132 = vld [vmem:[%s1130 + $0x8] sm:$0x7f]
        %s1133 = scalar_lea.vmem %s224, 80
        %v1134 = vld [vmem:[%s1133] sm:$0x7f]
        %v1135 = vld [vmem:[%s1133 + $0x8] sm:$0x7f]
        %v1136 = vlaneseq
        %v1137 = vshrl.u32 %v1136, 7
        %v1138 = vsub.s32 0, %v1137
        %v1139 = vrot.slane %v1131, %v1138
        %v1140 = vlaneseq
        %v1141 = vshrl.u32 %v1140, 7
        %v1142 = vsub.s32 0, %v1141
        %v1143 = vrot.slane %v1132, %v1142
        %v1144 = vmul.f32 %v1139, %v1134
        %v1145 = vmul.f32 %v1143, %v1135
        %1146 = vst [vmem:[#allocation2] sm:$0x7f] %v1144
        %1147 = vst [vmem:[#allocation2 + $0x8] sm:$0x7f] %v1145
        %v1148 = vlaneseq
        %v1149 = vshrl.u32 %v1148, 7
        %v1150 = vsub.s32 1, %v1149
        %v1151 = vrot.slane %v1131, %v1150
        %v1152 = vlaneseq
        %v1153 = vshrl.u32 %v1152, 7
        %v1154 = vsub.s32 1, %v1153
        %v1155 = vrot.slane %v1132, %v1154
        %v1156 = vmul.f32 %v1151, %v1134
        %v1157 = vmul.f32 %v1155, %v1135
        %1158 = vst [vmem:[#allocation2 + $0x10] sm:$0x7f] %v1156
        %1159 = vst [vmem:[#allocation2 + $0x18] sm:$0x7f] %v1157
        %v1160 = vlaneseq
        %v1161 = vshrl.u32 %v1160, 7
        %v1162 = vsub.s32 2, %v1161
        %v1163 = vrot.slane %v1131, %v1162
        %v1164 = vlaneseq
        %v1165 = vshrl.u32 %v1164, 7
        %v1166 = vsub.s32 2, %v1165
        %v1167 = vrot.slane %v1132, %v1166
        %v1168 = vmul.f32 %v1163, %v1134
        %v1169 = vmul.f32 %v1167, %v1135
        %1170 = vst [vmem:[#allocation2 + $0x20] sm:$0x7f] %v1168
        %1171 = vst [vmem:[#allocation2 + $0x28] sm:$0x7f] %v1169
        %v1172 = vlaneseq
        %v1173 = vshrl.u32 %v1172, 7
        %v1174 = vsub.s32 3, %v1173
        %v1175 = vrot.slane %v1131, %v1174
        %v1176 = vlaneseq
        %v1177 = vshrl.u32 %v1176, 7
        %v1178 = vsub.s32 3, %v1177
        %v1179 = vrot.slane %v1132, %v1178
        %v1180 = vmul.f32 %v1175, %v1134
        %v1181 = vmul.f32 %v1179, %v1135
        %1182 = vst [vmem:[#allocation2 + $0x30] sm:$0x7f] %v1180
        %1183 = vst [vmem:[#allocation2 + $0x38] sm:$0x7f] %v1181
        %v1184 = vlaneseq
        %v1185 = vshrl.u32 %v1184, 7
        %v1186 = vsub.s32 4, %v1185
        %v1187 = vrot.slane %v1131, %v1186
        %v1188 = vlaneseq
        %v1189 = vshrl.u32 %v1188, 7
        %v1190 = vsub.s32 4, %v1189
        %v1191 = vrot.slane %v1132, %v1190
        %v1192 = vmul.f32 %v1187, %v1134
        %v1193 = vmul.f32 %v1191, %v1135
        %1194 = vst [vmem:[#allocation2 + $0x40] sm:$0x7f] %v1192
        %1195 = vst [vmem:[#allocation2 + $0x48] sm:$0x7f] %v1193
        %v1196 = vlaneseq
        %v1197 = vshrl.u32 %v1196, 7
        %v1198 = vsub.s32 5, %v1197
        %v1199 = vrot.slane %v1131, %v1198
        %v1200 = vlaneseq
        %v1201 = vshrl.u32 %v1200, 7
        %v1202 = vsub.s32 5, %v1201
        %v1203 = vrot.slane %v1132, %v1202
        %v1204 = vmul.f32 %v1199, %v1134
        %v1205 = vmul.f32 %v1203, %v1135
        %1206 = vst [vmem:[#allocation2 + $0x50] sm:$0x7f] %v1204
        %1207 = vst [vmem:[#allocation2 + $0x58] sm:$0x7f] %v1205
        %v1208 = vlaneseq
        %v1209 = vshrl.u32 %v1208, 7
        %v1210 = vsub.s32 6, %v1209
        %v1211 = vrot.slane %v1131, %v1210
        %v1212 = vlaneseq
        %v1213 = vshrl.u32 %v1212, 7
        %v1214 = vsub.s32 6, %v1213
        %v1215 = vrot.slane %v1132, %v1214
        %v1216 = vmul.f32 %v1211, %v1134
        %v1217 = vmul.f32 %v1215, %v1135
        %1218 = vst [vmem:[#allocation2 + $0x60] sm:$0x7f] %v1216
        %1219 = vst [vmem:[#allocation2 + $0x68] sm:$0x7f] %v1217
        %v1220 = vld [vmem:[#allocation2] sm:$0xff]
        %v1221 = vld [vmem:[#allocation2 + $0x8] sm:$0xff]
        %v1222 = vld [vmem:[#allocation2 + $0x10] sm:$0xff]
        %v1223 = vld [vmem:[#allocation2 + $0x18] sm:$0xff]
        %v1224 = vld [vmem:[#allocation2 + $0x20] sm:$0xff]
        %v1225 = vld [vmem:[#allocation2 + $0x28] sm:$0xff]
        %v1226 = vld [vmem:[#allocation2 + $0x30] sm:$0xff]
        %v1227 = vld [vmem:[#allocation2 + $0x38] sm:$0xff]
        %v1228 = vld [vmem:[#allocation2 + $0x40] sm:$0xff]
        %v1229 = vld [vmem:[#allocation2 + $0x48] sm:$0xff]
        %v1230 = vld [vmem:[#allocation2 + $0x50] sm:$0xff]
        %v1231 = vld [vmem:[#allocation2 + $0x58] sm:$0xff]
        %v1232 = vld [vmem:[#allocation2 + $0x60] sm:$0xff]
        %v1233 = vld [vmem:[#allocation2 + $0x68] sm:$0xff]
        %1234 = vmatprep.subr.mxu0 %v1221
        %1235 = vmatpush1.xpose.msra.mxu0 %v1220
        %1236 = vmatprep.subr.mxu0 %v1223
        %1237 = vmatpush1.xpose.msra.mxu0 %v1222
        %1238 = vmatprep.subr.mxu0 %v1225
        %1239 = vmatpush1.xpose.msra.mxu0 %v1224
        %1240 = vmatprep.subr.mxu0 %v1227
        %1241 = vmatpush1.xpose.msra.mxu0 %v1226
        %1242 = vmatprep.subr.mxu0 %v1229
        %1243 = vmatpush1.xpose.msra.mxu0 %v1228
        %1244 = vmatprep.subr.mxu0 %v1231
        %1245 = vmatpush1.xpose.msra.mxu0 %v1230
        %1246 = vmatprep.subr.mxu0 %v1233
        %1247 = vmatpush1.xpose.msra.mxu0 %v1232
        %1248 = vmatprep.subr.mxu0 0.0
        %1249 = vmatpush1.xpose.msra.mxu0 0.0
        %1250 = vmatprep.subr.mxu0 0.0
        %1251 = vmatpush1.xpose.msra.mxu0 0.0
        %1252 = vmatprep.subr.mxu0 0.0
        %1253 = vmatpush1.xpose.msra.mxu0 0.0
        %1254 = vmatprep.subr.mxu0 0.0
        %1255 = vmatpush1.xpose.msra.mxu0 0.0
        %1256 = vmatprep.subr.mxu0 0.0
        %1257 = vmatpush1.xpose.msra.mxu0 0.0
        %1258 = vmatprep.subr.mxu0 0.0
        %1259 = vmatpush1.xpose.msra.mxu0 0.0
        %1260 = vmatprep.subr.mxu0 0.0
        %1261 = vmatpush1.xpose.msra.mxu0 0.0
        %1262 = vmatprep.subr.mxu0 0.0
        %1263 = vmatpush1.xpose.msra.mxu0 0.0
        %1264 = vmatprep.subr.mxu0 0.0
        %1265 = vmatpush1.xpose.msra.mxu0 0.0
        %1266 = vmatprep.subr.mxu0 0.0
        %1267 = vmatpush1.xpose.msra.mxu0 0.0
        %1268 = vmatprep.subr.mxu0 0.0
        %1269 = vmatpush1.xpose.msra.mxu0 0.0
        %1270 = vmatprep.subr.mxu0 0.0
        %1271 = vmatpush1.xpose.msra.mxu0 0.0
        %1272 = vmatprep.subr.mxu0 0.0
        %1273 = vmatpush1.xpose.msra.mxu0 0.0
        %1274 = vmatprep.subr.mxu0 0.0
        %1275 = vmatpush1.xpose.msra.mxu0 0.0
        %1276 = vmatprep.subr.mxu0 0.0
        %1277 = vmatpush1.xpose.msra.mxu0 0.0
        %1278 = vmatprep.subr.mxu0 0.0
        %1279 = vmatpush1.xpose.msra.mxu0 0.0
        %1280 = vmatprep.subr.mxu0 0.0
        %1281 = vmatpush1.xpose.msra.mxu0 0.0
        %1282 = vmatprep.subr.mxu0 0.0
        %1283 = vmatpush1.xpose.msra.mxu0 0.0
        %1284 = vmatprep.subr.mxu0 0.0
        %1285 = vmatpush1.xpose.msra.mxu0 0.0
        %1286 = vmatprep.subr.mxu0 0.0
        %1287 = vmatpush1.xpose.msra.mxu0 0.0
        %1288 = vmatprep.subr.mxu0 0.0
        %1289 = vmatpush1.xpose.msra.mxu0 0.0
        %1290 = vmatprep.subr.mxu0 0.0
        %1291 = vmatpush1.xpose.msra.mxu0 0.0
        %1292 = vmatprep.subr.mxu0 0.0
        %1293 = vmatpush1.xpose.msra.mxu0 0.0
        %1294 = vmatprep.subr.mxu0 0.0
        %1295 = vmatpush1.xpose.msra.mxu0 0.0
        %1296 = vmatprep.subr.mxu0 0.0
        %1297 = vmatpush1.xpose.msra.mxu0 0.0
        %1298 = vmatprep.mubr.f32.mxu0 %v352
        %1299 = vmatmul.mubr.f32.gmra.mrb[0].mxu0 %v234
        %v1300 = vpop.f32.mrb[0].mxu0
        %v1301 = vadd.f32 0.0, %v1300
        %v1302 = vpop.f32.mrb[0].mxu0
        %1303 = vdwg.mxu0
        %s1304 = scalar_lea.vmem %s211, 20 [#allocation5]
        %1305 = vst.msk [vmem:[%s1304] sm:$0xf] %vm424, %v1301
        %s1306 = scalar_lea.vmem %s217, 96
        %v1307 = vld [vmem:[%s1306] sm:$0x7f]
        %v1308 = vld [vmem:[%s1306 + $0x8] sm:$0x7f]
        %s1309 = scalar_lea.vmem %s224, 96
        %v1310 = vld [vmem:[%s1309] sm:$0x7f]
        %v1311 = vld [vmem:[%s1309 + $0x8] sm:$0x7f]
        %v1312 = vlaneseq
        %v1313 = vshrl.u32 %v1312, 7
        %v1314 = vsub.s32 0, %v1313
        %v1315 = vrot.slane %v1307, %v1314
        %v1316 = vlaneseq
        %v1317 = vshrl.u32 %v1316, 7
        %v1318 = vsub.s32 0, %v1317
        %v1319 = vrot.slane %v1308, %v1318
        %v1320 = vmul.f32 %v1315, %v1310
        %v1321 = vmul.f32 %v1319, %v1311
        %1322 = vst [vmem:[#allocation2] sm:$0x7f] %v1320
        %1323 = vst [vmem:[#allocation2 + $0x8] sm:$0x7f] %v1321
        %v1324 = vlaneseq
        %v1325 = vshrl.u32 %v1324, 7
        %v1326 = vsub.s32 1, %v1325
        %v1327 = vrot.slane %v1307, %v1326
        %v1328 = vlaneseq
        %v1329 = vshrl.u32 %v1328, 7
        %v1330 = vsub.s32 1, %v1329
        %v1331 = vrot.slane %v1308, %v1330
        %v1332 = vmul.f32 %v1327, %v1310
        %v1333 = vmul.f32 %v1331, %v1311
        %1334 = vst [vmem:[#allocation2 + $0x10] sm:$0x7f] %v1332
        %1335 = vst [vmem:[#allocation2 + $0x18] sm:$0x7f] %v1333
        %v1336 = vlaneseq
        %v1337 = vshrl.u32 %v1336, 7
        %v1338 = vsub.s32 2, %v1337
        %v1339 = vrot.slane %v1307, %v1338
        %v1340 = vlaneseq
        %v1341 = vshrl.u32 %v1340, 7
        %v1342 = vsub.s32 2, %v1341
        %v1343 = vrot.slane %v1308, %v1342
        %v1344 = vmul.f32 %v1339, %v1310
        %v1345 = vmul.f32 %v1343, %v1311
        %1346 = vst [vmem:[#allocation2 + $0x20] sm:$0x7f] %v1344
        %1347 = vst [vmem:[#allocation2 + $0x28] sm:$0x7f] %v1345
        %v1348 = vlaneseq
        %v1349 = vshrl.u32 %v1348, 7
        %v1350 = vsub.s32 3, %v1349
        %v1351 = vrot.slane %v1307, %v1350
        %v1352 = vlaneseq
        %v1353 = vshrl.u32 %v1352, 7
        %v1354 = vsub.s32 3, %v1353
        %v1355 = vrot.slane %v1308, %v1354
        %v1356 = vmul.f32 %v1351, %v1310
        %v1357 = vmul.f32 %v1355, %v1311
        %1358 = vst [vmem:[#allocation2 + $0x30] sm:$0x7f] %v1356
        %1359 = vst [vmem:[#allocation2 + $0x38] sm:$0x7f] %v1357
        %v1360 = vlaneseq
        %v1361 = vshrl.u32 %v1360, 7
        %v1362 = vsub.s32 4, %v1361
        %v1363 = vrot.slane %v1307, %v1362
        %v1364 = vlaneseq
        %v1365 = vshrl.u32 %v1364, 7
        %v1366 = vsub.s32 4, %v1365
        %v1367 = vrot.slane %v1308, %v1366
        %v1368 = vmul.f32 %v1363, %v1310
        %v1369 = vmul.f32 %v1367, %v1311
        %1370 = vst [vmem:[#allocation2 + $0x40] sm:$0x7f] %v1368
        %1371 = vst [vmem:[#allocation2 + $0x48] sm:$0x7f] %v1369
        %v1372 = vlaneseq
        %v1373 = vshrl.u32 %v1372, 7
        %v1374 = vsub.s32 5, %v1373
        %v1375 = vrot.slane %v1307, %v1374
        %v1376 = vlaneseq
        %v1377 = vshrl.u32 %v1376, 7
        %v1378 = vsub.s32 5, %v1377
        %v1379 = vrot.slane %v1308, %v1378
        %v1380 = vmul.f32 %v1375, %v1310
        %v1381 = vmul.f32 %v1379, %v1311
        %1382 = vst [vmem:[#allocation2 + $0x50] sm:$0x7f] %v1380
        %1383 = vst [vmem:[#allocation2 + $0x58] sm:$0x7f] %v1381
        %v1384 = vlaneseq
        %v1385 = vshrl.u32 %v1384, 7
        %v1386 = vsub.s32 6, %v1385
        %v1387 = vrot.slane %v1307, %v1386
        %v1388 = vlaneseq
        %v1389 = vshrl.u32 %v1388, 7
        %v1390 = vsub.s32 6, %v1389
        %v1391 = vrot.slane %v1308, %v1390
        %v1392 = vmul.f32 %v1387, %v1310
        %v1393 = vmul.f32 %v1391, %v1311
        %1394 = vst [vmem:[#allocation2 + $0x60] sm:$0x7f] %v1392
        %1395 = vst [vmem:[#allocation2 + $0x68] sm:$0x7f] %v1393
        %v1396 = vld [vmem:[#allocation2] sm:$0xff]
        %v1397 = vld [vmem:[#allocation2 + $0x8] sm:$0xff]
        %v1398 = vld [vmem:[#allocation2 + $0x10] sm:$0xff]
        %v1399 = vld [vmem:[#allocation2 + $0x18] sm:$0xff]
        %v1400 = vld [vmem:[#allocation2 + $0x20] sm:$0xff]
        %v1401 = vld [vmem:[#allocation2 + $0x28] sm:$0xff]
        %v1402 = vld [vmem:[#allocation2 + $0x30] sm:$0xff]
        %v1403 = vld [vmem:[#allocation2 + $0x38] sm:$0xff]
        %v1404 = vld [vmem:[#allocation2 + $0x40] sm:$0xff]
        %v1405 = vld [vmem:[#allocation2 + $0x48] sm:$0xff]
        %v1406 = vld [vmem:[#allocation2 + $0x50] sm:$0xff]
        %v1407 = vld [vmem:[#allocation2 + $0x58] sm:$0xff]
        %v1408 = vld [vmem:[#allocation2 + $0x60] sm:$0xff]
        %v1409 = vld [vmem:[#allocation2 + $0x68] sm:$0xff]
        %1410 = vmatprep.subr.mxu0 %v1397
        %1411 = vmatpush1.xpose.msra.mxu0 %v1396
        %1412 = vmatprep.subr.mxu0 %v1399
        %1413 = vmatpush1.xpose.msra.mxu0 %v1398
        %1414 = vmatprep.subr.mxu0 %v1401
        %1415 = vmatpush1.xpose.msra.mxu0 %v1400
        %1416 = vmatprep.subr.mxu0 %v1403
        %1417 = vmatpush1.xpose.msra.mxu0 %v1402
        %1418 = vmatprep.subr.mxu0 %v1405
        %1419 = vmatpush1.xpose.msra.mxu0 %v1404
        %1420 = vmatprep.subr.mxu0 %v1407
        %1421 = vmatpush1.xpose.msra.mxu0 %v1406
        %1422 = vmatprep.subr.mxu0 %v1409
        %1423 = vmatpush1.xpose.msra.mxu0 %v1408
        %1424 = vmatprep.subr.mxu0 0.0
        %1425 = vmatpush1.xpose.msra.mxu0 0.0
        %1426 = vmatprep.subr.mxu0 0.0
        %1427 = vmatpush1.xpose.msra.mxu0 0.0
        %1428 = vmatprep.subr.mxu0 0.0
        %1429 = vmatpush1.xpose.msra.mxu0 0.0
        %1430 = vmatprep.subr.mxu0 0.0
        %1431 = vmatpush1.xpose.msra.mxu0 0.0
        %1432 = vmatprep.subr.mxu0 0.0
        %1433 = vmatpush1.xpose.msra.mxu0 0.0
        %1434 = vmatprep.subr.mxu0 0.0
        %1435 = vmatpush1.xpose.msra.mxu0 0.0
        %1436 = vmatprep.subr.mxu0 0.0
        %1437 = vmatpush1.xpose.msra.mxu0 0.0
        %1438 = vmatprep.subr.mxu0 0.0
        %1439 = vmatpush1.xpose.msra.mxu0 0.0
        %1440 = vmatprep.subr.mxu0 0.0
        %1441 = vmatpush1.xpose.msra.mxu0 0.0
        %1442 = vmatprep.subr.mxu0 0.0
        %1443 = vmatpush1.xpose.msra.mxu0 0.0
        %1444 = vmatprep.subr.mxu0 0.0
        %1445 = vmatpush1.xpose.msra.mxu0 0.0
        %1446 = vmatprep.subr.mxu0 0.0
        %1447 = vmatpush1.xpose.msra.mxu0 0.0
        %1448 = vmatprep.subr.mxu0 0.0
        %1449 = vmatpush1.xpose.msra.mxu0 0.0
        %1450 = vmatprep.subr.mxu0 0.0
        %1451 = vmatpush1.xpose.msra.mxu0 0.0
        %1452 = vmatprep.subr.mxu0 0.0
        %1453 = vmatpush1.xpose.msra.mxu0 0.0
        %1454 = vmatprep.subr.mxu0 0.0
        %1455 = vmatpush1.xpose.msra.mxu0 0.0
        %1456 = vmatprep.subr.mxu0 0.0
        %1457 = vmatpush1.xpose.msra.mxu0 0.0
        %1458 = vmatprep.subr.mxu0 0.0
        %1459 = vmatpush1.xpose.msra.mxu0 0.0
        %1460 = vmatprep.subr.mxu0 0.0
        %1461 = vmatpush1.xpose.msra.mxu0 0.0
        %1462 = vmatprep.subr.mxu0 0.0
        %1463 = vmatpush1.xpose.msra.mxu0 0.0
        %1464 = vmatprep.subr.mxu0 0.0
        %1465 = vmatpush1.xpose.msra.mxu0 0.0
        %1466 = vmatprep.subr.mxu0 0.0
        %1467 = vmatpush1.xpose.msra.mxu0 0.0
        %1468 = vmatprep.subr.mxu0 0.0
        %1469 = vmatpush1.xpose.msra.mxu0 0.0
        %1470 = vmatprep.subr.mxu0 0.0
        %1471 = vmatpush1.xpose.msra.mxu0 0.0
        %1472 = vmatprep.subr.mxu0 0.0
        %1473 = vmatpush1.xpose.msra.mxu0 0.0
        %1474 = vmatprep.mubr.f32.mxu0 %v352
        %1475 = vmatmul.mubr.f32.gmra.mrb[0].mxu0 %v234
        %v1476 = vpop.f32.mrb[0].mxu0
        %v1477 = vadd.f32 0.0, %v1476
        %v1478 = vpop.f32.mrb[0].mxu0
        %1479 = vdwg.mxu0
        %s1480 = scalar_lea.vmem %s211, 24 [#allocation5]
        %1481 = vst.msk [vmem:[%s1480] sm:$0xf] %vm424, %v1477
        %s1482 = scalar_lea.vmem %s217, 112
        %v1483 = vld [vmem:[%s1482] sm:$0x7f]
        %v1484 = vld [vmem:[%s1482 + $0x8] sm:$0x7f]
        %s1485 = scalar_lea.vmem %s224, 112
        %v1486 = vld [vmem:[%s1485] sm:$0x7f]
        %v1487 = vld [vmem:[%s1485 + $0x8] sm:$0x7f]
        %v1488 = vlaneseq
        %v1489 = vshrl.u32 %v1488, 7
        %v1490 = vsub.s32 0, %v1489
        %v1491 = vrot.slane %v1483, %v1490
        %v1492 = vlaneseq
        %v1493 = vshrl.u32 %v1492, 7
        %v1494 = vsub.s32 0, %v1493
        %v1495 = vrot.slane %v1484, %v1494
        %v1496 = vmul.f32 %v1491, %v1486
        %v1497 = vmul.f32 %v1495, %v1487
        %1498 = vst [vmem:[#allocation2] sm:$0x7f] %v1496
        %1499 = vst [vmem:[#allocation2 + $0x8] sm:$0x7f] %v1497
        %v1500 = vlaneseq
        %v1501 = vshrl.u32 %v1500, 7
        %v1502 = vsub.s32 1, %v1501
        %v1503 = vrot.slane %v1483, %v1502
        %v1504 = vlaneseq
        %v1505 = vshrl.u32 %v1504, 7
        %v1506 = vsub.s32 1, %v1505
        %v1507 = vrot.slane %v1484, %v1506
        %v1508 = vmul.f32 %v1503, %v1486
        %v1509 = vmul.f32 %v1507, %v1487
        %1510 = vst [vmem:[#allocation2 + $0x10] sm:$0x7f] %v1508
        %1511 = vst [vmem:[#allocation2 + $0x18] sm:$0x7f] %v1509
        %v1512 = vlaneseq
        %v1513 = vshrl.u32 %v1512, 7
        %v1514 = vsub.s32 2, %v1513
        %v1515 = vrot.slane %v1483, %v1514
        %v1516 = vlaneseq
        %v1517 = vshrl.u32 %v1516, 7
        %v1518 = vsub.s32 2, %v1517
        %v1519 = vrot.slane %v1484, %v1518
        %v1520 = vmul.f32 %v1515, %v1486
        %v1521 = vmul.f32 %v1519, %v1487
        %1522 = vst [vmem:[#allocation2 + $0x20] sm:$0x7f] %v1520
        %1523 = vst [vmem:[#allocation2 + $0x28] sm:$0x7f] %v1521
        %v1524 = vlaneseq
        %v1525 = vshrl.u32 %v1524, 7
        %v1526 = vsub.s32 3, %v1525
        %v1527 = vrot.slane %v1483, %v1526
        %v1528 = vlaneseq
        %v1529 = vshrl.u32 %v1528, 7
        %v1530 = vsub.s32 3, %v1529
        %v1531 = vrot.slane %v1484, %v1530
        %v1532 = vmul.f32 %v1527, %v1486
        %v1533 = vmul.f32 %v1531, %v1487
        %1534 = vst [vmem:[#allocation2 + $0x30] sm:$0x7f] %v1532
        %1535 = vst [vmem:[#allocation2 + $0x38] sm:$0x7f] %v1533
        %v1536 = vlaneseq
        %v1537 = vshrl.u32 %v1536, 7
        %v1538 = vsub.s32 4, %v1537
        %v1539 = vrot.slane %v1483, %v1538
        %v1540 = vlaneseq
        %v1541 = vshrl.u32 %v1540, 7
        %v1542 = vsub.s32 4, %v1541
        %v1543 = vrot.slane %v1484, %v1542
        %v1544 = vmul.f32 %v1539, %v1486
        %v1545 = vmul.f32 %v1543, %v1487
        %1546 = vst [vmem:[#allocation2 + $0x40] sm:$0x7f] %v1544
        %1547 = vst [vmem:[#allocation2 + $0x48] sm:$0x7f] %v1545
        %v1548 = vlaneseq
        %v1549 = vshrl.u32 %v1548, 7
        %v1550 = vsub.s32 5, %v1549
        %v1551 = vrot.slane %v1483, %v1550
        %v1552 = vlaneseq
        %v1553 = vshrl.u32 %v1552, 7
        %v1554 = vsub.s32 5, %v1553
        %v1555 = vrot.slane %v1484, %v1554
        %v1556 = vmul.f32 %v1551, %v1486
        %v1557 = vmul.f32 %v1555, %v1487
        %1558 = vst [vmem:[#allocation2 + $0x50] sm:$0x7f] %v1556
        %1559 = vst [vmem:[#allocation2 + $0x58] sm:$0x7f] %v1557
        %v1560 = vlaneseq
        %v1561 = vshrl.u32 %v1560, 7
        %v1562 = vsub.s32 6, %v1561
        %v1563 = vrot.slane %v1483, %v1562
        %v1564 = vlaneseq
        %v1565 = vshrl.u32 %v1564, 7
        %v1566 = vsub.s32 6, %v1565
        %v1567 = vrot.slane %v1484, %v1566
        %v1568 = vmul.f32 %v1563, %v1486
        %v1569 = vmul.f32 %v1567, %v1487
        %1570 = vst [vmem:[#allocation2 + $0x60] sm:$0x7f] %v1568
        %1571 = vst [vmem:[#allocation2 + $0x68] sm:$0x7f] %v1569
        %v1572 = vld [vmem:[#allocation2] sm:$0xff]
        %v1573 = vld [vmem:[#allocation2 + $0x8] sm:$0xff]
        %v1574 = vld [vmem:[#allocation2 + $0x10] sm:$0xff]
        %v1575 = vld [vmem:[#allocation2 + $0x18] sm:$0xff]
        %v1576 = vld [vmem:[#allocation2 + $0x20] sm:$0xff]
        %v1577 = vld [vmem:[#allocation2 + $0x28] sm:$0xff]
        %v1578 = vld [vmem:[#allocation2 + $0x30] sm:$0xff]
        %v1579 = vld [vmem:[#allocation2 + $0x38] sm:$0xff]
        %v1580 = vld [vmem:[#allocation2 + $0x40] sm:$0xff]
        %v1581 = vld [vmem:[#allocation2 + $0x48] sm:$0xff]
        %v1582 = vld [vmem:[#allocation2 + $0x50] sm:$0xff]
        %v1583 = vld [vmem:[#allocation2 + $0x58] sm:$0xff]
        %v1584 = vld [vmem:[#allocation2 + $0x60] sm:$0xff]
        %v1585 = vld [vmem:[#allocation2 + $0x68] sm:$0xff]
        %1586 = vmatprep.subr.mxu0 %v1573
        %1587 = vmatpush1.xpose.msra.mxu0 %v1572
        %1588 = vmatprep.subr.mxu0 %v1575
        %1589 = vmatpush1.xpose.msra.mxu0 %v1574
        %1590 = vmatprep.subr.mxu0 %v1577
        %1591 = vmatpush1.xpose.msra.mxu0 %v1576
        %1592 = vmatprep.subr.mxu0 %v1579
        %1593 = vmatpush1.xpose.msra.mxu0 %v1578
        %1594 = vmatprep.subr.mxu0 %v1581
        %1595 = vmatpush1.xpose.msra.mxu0 %v1580
        %1596 = vmatprep.subr.mxu0 %v1583
        %1597 = vmatpush1.xpose.msra.mxu0 %v1582
        %1598 = vmatprep.subr.mxu0 %v1585
        %1599 = vmatpush1.xpose.msra.mxu0 %v1584
        %1600 = vmatprep.subr.mxu0 0.0
        %1601 = vmatpush1.xpose.msra.mxu0 0.0
        %1602 = vmatprep.subr.mxu0 0.0
        %1603 = vmatpush1.xpose.msra.mxu0 0.0
        %1604 = vmatprep.subr.mxu0 0.0
        %1605 = vmatpush1.xpose.msra.mxu0 0.0
        %1606 = vmatprep.subr.mxu0 0.0
        %1607 = vmatpush1.xpose.msra.mxu0 0.0
        %1608 = vmatprep.subr.mxu0 0.0
        %1609 = vmatpush1.xpose.msra.mxu0 0.0
        %1610 = vmatprep.subr.mxu0 0.0
        %1611 = vmatpush1.xpose.msra.mxu0 0.0
        %1612 = vmatprep.subr.mxu0 0.0
        %1613 = vmatpush1.xpose.msra.mxu0 0.0
        %1614 = vmatprep.subr.mxu0 0.0
        %1615 = vmatpush1.xpose.msra.mxu0 0.0
        %1616 = vmatprep.subr.mxu0 0.0
        %1617 = vmatpush1.xpose.msra.mxu0 0.0
        %1618 = vmatprep.subr.mxu0 0.0
        %1619 = vmatpush1.xpose.msra.mxu0 0.0
        %1620 = vmatprep.subr.mxu0 0.0
        %1621 = vmatpush1.xpose.msra.mxu0 0.0
        %1622 = vmatprep.subr.mxu0 0.0
        %1623 = vmatpush1.xpose.msra.mxu0 0.0
        %1624 = vmatprep.subr.mxu0 0.0
        %1625 = vmatpush1.xpose.msra.mxu0 0.0
        %1626 = vmatprep.subr.mxu0 0.0
        %1627 = vmatpush1.xpose.msra.mxu0 0.0
        %1628 = vmatprep.subr.mxu0 0.0
        %1629 = vmatpush1.xpose.msra.mxu0 0.0
        %1630 = vmatprep.subr.mxu0 0.0
        %1631 = vmatpush1.xpose.msra.mxu0 0.0
        %1632 = vmatprep.subr.mxu0 0.0
        %1633 = vmatpush1.xpose.msra.mxu0 0.0
        %1634 = vmatprep.subr.mxu0 0.0
        %1635 = vmatpush1.xpose.msra.mxu0 0.0
        %1636 = vmatprep.subr.mxu0 0.0
        %1637 = vmatpush1.xpose.msra.mxu0 0.0
        %1638 = vmatprep.subr.mxu0 0.0
        %1639 = vmatpush1.xpose.msra.mxu0 0.0
        %1640 = vmatprep.subr.mxu0 0.0
        %1641 = vmatpush1.xpose.msra.mxu0 0.0
        %1642 = vmatprep.subr.mxu0 0.0
        %1643 = vmatpush1.xpose.msra.mxu0 0.0
        %1644 = vmatprep.subr.mxu0 0.0
        %1645 = vmatpush1.xpose.msra.mxu0 0.0
        %1646 = vmatprep.subr.mxu0 0.0
        %1647 = vmatpush1.xpose.msra.mxu0 0.0
        %1648 = vmatprep.subr.mxu0 0.0
        %1649 = vmatpush1.xpose.msra.mxu0 0.0
        %1650 = vmatprep.mubr.f32.mxu0 %v352
        %1651 = vmatmul.mubr.f32.gmra.mrb[0].mxu0 %v234
        %v1652 = vpop.f32.mrb[0].mxu0
        %v1653 = vadd.f32 0.0, %v1652
        %v1654 = vpop.f32.mrb[0].mxu0
        %1655 = vdwg.mxu0
        %s1656 = scalar_lea.vmem %s211, 28 [#allocation5]
        %1657 = vst.msk [vmem:[%s1656] sm:$0xf] %vm424, %v1653
        %s1658 = sand.u32 %s112, 1
        %s1659 = scalar_lea.sflag [#allocation6], %s1658
        %s1660 = sand.u32 %s112, 1
        %s1661 = smul.addr %s1660, 32
        %s1662 = scalar_lea.vmem [#allocation5], %s1661
        // Predicated region
        $region33: #{tpu_custom_call.1} parent=31 // pred_check
          %p1663 = pneg %p122
        $region34: #{tpu_custom_call.1} parent=31 // pred_check_branch
          %1665 = sbr.rel (%p1663) target = $region36
        $region35: #{tpu_custom_call.1} parent=31 // pred_region
          %s1666 = smul.u32 8, %s24
          %s1668 = ssub.s32 512, 512
          %1669 = vsyncadd %s1659, %s1668
          %s1670 = smul.addr %s1666, 64
          %s1671 = scalar_lea.hbm %s4, %s1670
          %s1672 = sshll.u32 %s1662, 4
          %s1673 = int_to_ptr.vmem [resolvable:$true] %s1672
          %1678 = dma.vmem_to_hbm [thread:$0]  %s1673, 512, %s1671, %s1659, 64, 64, 4
        $region36: #{tpu_custom_call.1} parent=31 // pred_fallthru
          _
      $region32: #{tpu_custom_call.1} parent=5 // pred_fallthru
        _
      %p1679 = scmp.le.s32.totalorder 2, %s19
      // Predicated region
      $region37: #{tpu_custom_call.1} parent=5 // pred_check
        %p1680 = pneg %p1679
      $region38: #{tpu_custom_call.1} parent=5 // pred_check_branch
        %1682 = sbr.rel (%p1680) target = $region40
      $region39: #{tpu_custom_call.1} parent=5 // pred_region
        %s1683 = ssub.s32 %s19, 2
        // Predicated region
        $region41: #{tpu_custom_call.1} parent=39 // pred_check
          %p1684 = pneg %p128
        $region42: #{tpu_custom_call.1} parent=39 // pred_check_branch
          %1686 = sbr.rel (%p1684) target = $region44
        $region43: #{tpu_custom_call.1} parent=39 // pred_region
          %s1687 = sand.u32 %s113, 1
          %s1688 = scalar_lea.sflag [#allocation6], %s1687
          %s1689 = sand.u32 %s113, 1
          %s1690 = smul.addr %s1689, 32
          %s1691 = scalar_lea.vmem [#allocation5], %s1690
          %1692 = dma.done %s1688, 512
        $region44: #{tpu_custom_call.1} parent=39 // pred_fallthru
          _
      $region40: #{tpu_custom_call.1} parent=5 // pred_fallthru
        _
    $region6: #{tpu_custom_call.1} parent=1 // loop_footer
      %s23 = sadd.s32 1, %s19
    $region7: #{tpu_custom_call.1} parent=1 // loop_footer_branch
      %18 = sbr.rel target = $region3
    $region8: #{tpu_custom_call.1} parent=1 // loop_exit
      _
    %1693 = vsyncpa [#allocation6], 1
    %s1694 = scalar_lea.sflag [#allocation6], 1
    %1695 = vsyncpa %s1694, 1

</llo_original>
